<compile_context>
chip_gen: v5e
topology: v5e:2x2
jax: 0.10.0
libtpu: 0.0.40
codegen_flags: <defaults>
</compile_context>

<pallas_src>
import math
import functools

import jax
import jax.numpy as jnp
from jax import lax
from jax.experimental import pallas as pl
from jax.experimental.pallas import tpu as pltpu


# ------------------------------------------------------------------ config --
class DeepseekConfig:
    # Small, lane-friendly test configuration consistent with the module.
    d_model = 128
    num_heads = 4
    num_kv_heads = 2
    hidden_dim = 256          # SwiGLU hidden dim (lane-dense; config allows it)
    multiple_of = 4
    dropout = 0.2             # identity at eval
    bias = False
    moe = False
    seq_len = 64
    rms_eps = 1e-5            # RMSNorm eps from the reference (1e-05)


def swiglu_hidden_dim(dim, hidden_dim, multiple_of):
    if hidden_dim is None:
        hidden_dim = 4 * dim
        hidden_dim = int(2 * hidden_dim / 3)
        hidden_dim = multiple_of * ((hidden_dim + multiple_of - 1) // multiple_of)
    return hidden_dim


# ---------------------------------------------------------------- rope prep --
def precompute_rope_cos_sin(head_dim, seq_len, theta=10000.0):
    """cos/sin of the llama-style freqs_cis, shape (S, head_dim//2), f32."""
    inv_freq = 1.0 / (theta ** (jnp.arange(0, head_dim, 2, dtype=jnp.float32) / head_dim))
    t = jnp.arange(seq_len, dtype=jnp.float32)
    freqs = jnp.outer(t, inv_freq)
    return jnp.cos(freqs), jnp.sin(freqs)


# ------------------------------------------------------------ fused kernel --
def _block_kernel(x_ref, n1_ref, wqkv_ref, cos_ref, sin_ref, wo_ref,
                  n2_ref, w13_ref, w2_ref, o_ref,
                  *, H, KV, hd, F, eps):
    Bt, S, D = x_ref.shape
    M = Bt * S
    G = H // KV
    QKV = (H + 2 * KV) * hd
    k_off = H * hd
    v_off = (H + KV) * hd

    x = x_ref[...].reshape(M, D)                                   # (M, D) f32

    # ---- RMSNorm 1 (f32 statistics) ----
    h = x * lax.rsqrt(jnp.mean(x * x, axis=-1, keepdims=True) + eps) * n1_ref[...]

    # ---- fused q|k|v projection (1/sqrt(hd) already folded into wq) ----
    qkv = jnp.dot(h.astype(jnp.bfloat16), wqkv_ref[...],
                  preferred_element_type=jnp.float32)              # (M, QKV) f32

    # ---- slab RoPE on the full lane-dense qkv slab ----
    # Interleaved (even, odd) pairs: out_even = e*cos - o*sin,
    #                                out_odd  = o*cos + e*sin.
    # cos_ref/sin_ref carry (cos, +/-sin) over the q|k columns and (1, 0) over
    # the v columns, so v passes through unchanged. partner[j] = qkv[j+1] at
    # even j, qkv[j-1] at odd j (pairs never straddle head/slab boundaries).
    even = (lax.broadcasted_iota(jnp.int32, (M, QKV), 1) & 1) == 0
    partner = jnp.where(even,
                        pltpu.roll(qkv, QKV - 1, axis=1),          # qkv[:, j+1]
                        pltpu.roll(qkv, 1, axis=1))                # qkv[:, j-1]
    qkv_r = (qkv * cos_ref[...] + partner * sin_ref[...]).astype(jnp.bfloat16)

    # causal mask built in-kernel (no HBM mask input)
    row = lax.broadcasted_iota(jnp.int32, (S, S), 0)
    col = lax.broadcasted_iota(jnp.int32, (S, S), 1)
    causal = col <= row

    wo = wo_ref[...]                                               # (H*hd, D) bf16

    # ---- GQA attention: per-batch, per-head, wo accumulated per head ----
    attn_rows = []
    for b in range(Bt):                          # static unroll over batch rows
        r0 = b * S
        acc = jnp.zeros((S, D), jnp.float32)     # f32 accumulator (in vregs)
        for kv in range(KV):                     # static unroll over kv heads
            kh = qkv_r[r0:r0 + S, k_off + kv * hd: k_off + (kv + 1) * hd]
            vh = qkv_r[r0:r0 + S, v_off + kv * hd: v_off + (kv + 1) * hd]
            for g in range(G):                   # static unroll over q heads
                hq = kv * G + g
                qh = qkv_r[r0:r0 + S, hq * hd:(hq + 1) * hd]
                # contract on last axes -> no explicit k transpose
                s = lax.dot_general(qh, kh, (((1,), (1,)), ((), ())),
                                    preferred_element_type=jnp.float32)
                s = jnp.where(causal, s, jnp.float32(-1e30))
                s = s - jnp.max(s, axis=-1, keepdims=True)
                p = jnp.exp(s)
                p = p * pl.reciprocal(jnp.sum(p, axis=-1, keepdims=True),
                                      approx=True)
                pv = jnp.dot(p.astype(jnp.bfloat16), vh,
                             preferred_element_type=jnp.float32)   # (S, hd)
                # per-head output projection accumulation (no lane concat)
                acc = acc + jnp.dot(pv.astype(jnp.bfloat16),
                                    wo[hq * hd:(hq + 1) * hd, :],
                                    preferred_element_type=jnp.float32)
        attn_rows.append(acc)
    attn_out = attn_rows[0] if Bt == 1 else jnp.concatenate(attn_rows, axis=0)

    h1 = x + attn_out                                              # residual 1

    # ---- RMSNorm 2 + SwiGLU (w1|w3 fused) ----
    h1n = h1 * lax.rsqrt(jnp.mean(h1 * h1, axis=-1, keepdims=True) + eps) * n2_ref[...]
    h13 = jnp.dot(h1n.astype(jnp.bfloat16), w13_ref[...],
                  preferred_element_type=jnp.float32)              # (M, 2F)
    a, bgate = h13[:, :F], h13[:, F:]
    gated = a * jax.nn.sigmoid(a) * bgate                          # SiLU(w1 x) * (w3 x)
    ff = jnp.dot(gated.astype(jnp.bfloat16), w2_ref[...],
                 preferred_element_type=jnp.float32)               # (M, D)

    o_ref[...] = (h1 + ff).reshape(Bt, S, D).astype(o_ref.dtype)   # residual 2


# ---------------------------------------------------------------- wrapper --
def deepseek_block_forward(x, params, cos, sin, cfg, *, block_b=None):
    B, S, D = x.shape
    H, KV = cfg.num_heads, cfg.num_kv_heads
    hd = D // H
    F = swiglu_hidden_dim(D, cfg.hidden_dim, cfg.multiple_of)
    scale = 1.0 / math.sqrt(hd)
    QKV = (H + 2 * KV) * hd

    if block_b is None:
        # Fatten matmul M (v6e) but keep >= 2 "parallel" grid steps so both
        # v7x TensorCores get work.
        block_b = max(1, B // 2)
    assert B % block_b == 0
    Bt = block_b

    # --- one-time weight prep (layout plumbing, outside the hot kernel) ---
    # NOTE: 1/sqrt(hd) is folded into wq only; wk/wv/wo must stay unscaled.
    wqkv = jnp.concatenate(
        [params["wq"] * scale, params["wk"], params["wv"]],
        axis=1).astype(jnp.bfloat16)                               # (D, QKV)
    wo = params["wo"].astype(jnp.bfloat16)                         # (H*hd, D)
    w13 = jnp.concatenate([params["w1"], params["w3"]], axis=1).astype(jnp.bfloat16)
    w2 = params["w2"].astype(jnp.bfloat16)                         # (F, D)
    n1 = params["norm1"].reshape(1, D).astype(jnp.float32)
    n2 = params["norm2"].reshape(1, D).astype(jnp.float32)

    # --- lane-dense RoPE tables over the full fused q|k|v slab ---
    cos = cos.astype(jnp.float32)
    sin = sin.astype(jnp.float32)
    cos_i = jnp.repeat(cos, 2, axis=-1)                            # (S, hd): c0,c0,c1,c1,...
    sin_i = jnp.stack([-sin, sin], axis=-1).reshape(S, hd)         # -s0,s0,-s1,s1,...
    cos_all = jnp.concatenate([jnp.tile(cos_i, (1, H + KV)),
                               jnp.ones((S, KV * hd), jnp.float32)], axis=1)
    sin_all = jnp.concatenate([jnp.tile(sin_i, (1, H + KV)),
                               jnp.zeros((S, KV * hd), jnp.float32)], axis=1)
    cos_all = jnp.tile(cos_all, (Bt, 1))                           # (Bt*S, QKV)
    sin_all = jnp.tile(sin_all, (Bt, 1))

    kernel = functools.partial(_block_kernel, H=H, KV=KV, hd=hd, F=F,
                               eps=cfg.rms_eps)

    # TODO(synk): single-buffer the constant weight/cos/sin operands
    # (pipeline_mode=pl.Buffered(1)) once D/F grow; negligible at these dims.
    return pl.pallas_call(
        kernel,
        out_shape=jax.ShapeDtypeStruct((B, S, D), jnp.float32),
        grid=(B // Bt,),
        in_specs=[
            pl.BlockSpec((Bt, S, D), lambda b: (b, 0, 0)),         # x (residual stream)
            pl.BlockSpec((1, D), lambda b: (0, 0)),                # norm1 weight
            pl.BlockSpec((D, QKV), lambda b: (0, 0)),              # fused wq|wk|wv
            pl.BlockSpec((Bt * S, QKV), lambda b: (0, 0)),         # slab cos
            pl.BlockSpec((Bt * S, QKV), lambda b: (0, 0)),         # slab signed sin
            pl.BlockSpec((H * hd, D), lambda b: (0, 0)),           # wo
            pl.BlockSpec((1, D), lambda b: (0, 0)),                # norm2 weight
            pl.BlockSpec((D, 2 * F), lambda b: (0, 0)),            # fused w1|w3
            pl.BlockSpec((F, D), lambda b: (0, 0)),                # w2
        ],
        out_specs=pl.BlockSpec((Bt, S, D), lambda b: (b, 0, 0)),
        compiler_params=pltpu.CompilerParams(
            dimension_semantics=("parallel",)),                    # 2 TCs on v7x
    )(x.astype(jnp.float32), n1, wqkv, cos_all, sin_all, wo, n2, w13, w2)


# ------------------------------------------------------------------ params --
def init_params(cfg, key):
    D = cfg.d_model
    H, KV = cfg.num_heads, cfg.num_kv_heads
    hd = D // H
    F = swiglu_hidden_dim(D, cfg.hidden_dim, cfg.multiple_of)
    ks = jax.random.split(key, 7)
    lin = lambda k, fi, fo: 0.02 * jax.random.normal(k, (fi, fo), jnp.float32)
    return dict(
        norm1=jnp.ones((D,), jnp.float32),
        norm2=jnp.ones((D,), jnp.float32),
        wq=lin(ks[0], D, H * hd),
        wk=lin(ks[1], D, KV * hd),
        wv=lin(ks[2], D, KV * hd),
        wo=lin(ks[3], H * hd, D),
        w1=lin(ks[4], D, F),
        w3=lin(ks[5], D, F),
        w2=lin(ks[6], F, D),
    )


# -------------------------------------------------------------------- main --
if __name__ == "__main__":
    cfg = DeepseekConfig()
    B, S = 4, 16                                   # block_b=2 -> grid=(2,), M=32

    key = jax.random.PRNGKey(0)
    k_x, k_p = jax.random.split(key)
    x = jax.random.normal(k_x, (B, S, cfg.d_model), jnp.float32)
    params = init_params(cfg, k_p)

    head_dim = cfg.d_model // cfg.num_heads
    cos, sin = precompute_rope_cos_sin(head_dim, S)                # freqs_cis (cos/sin)

    out = deepseek_block_forward(x, params, cos, sin, cfg, block_b=2)
    jax.block_until_ready(out)
    assert out.shape == (B, S, cfg.d_model)
    assert bool(jnp.all(jnp.isfinite(out)))
    print("KERNEL_OK")
</pallas_src>

<mosaic_0001>
module attributes {stable_mosaic.version = 11 : i64} {
  func.func @_block_kernel(%arg0: i32, %arg1: memref<2x16x128xf32, #tpu.memory_space<vmem>>, %arg2: memref<1x128xf32, #tpu.memory_space<vmem>>, %arg3: memref<128x256xbf16, #tpu.memory_space<vmem>>, %arg4: memref<32x256xf32, #tpu.memory_space<vmem>>, %arg5: memref<32x256xf32, #tpu.memory_space<vmem>>, %arg6: memref<128x128xbf16, #tpu.memory_space<vmem>>, %arg7: memref<1x128xf32, #tpu.memory_space<vmem>>, %arg8: memref<128x512xbf16, #tpu.memory_space<vmem>>, %arg9: memref<256x128xbf16, #tpu.memory_space<vmem>>, %arg10: memref<2x16x128xf32, #tpu.memory_space<vmem>>) attributes {dimension_semantics = [#tpu.dimension_semantics<parallel>], iteration_bounds = array<i64: 2>, scalar_prefetch = 0 : i64, scratch_operands = 0 : i64, tpu.core_type = #tpu.core_type<tc>, window_params = [{transform_indices = @transform_0, window_bounds = array<i64: 2, 16, 128>}, {pipeline_mode = #tpu.pipeline_mode<synchronous>, transform_indices = @transform_1, window_bounds = array<i64: 1, 128>}, {pipeline_mode = #tpu.pipeline_mode<synchronous>, transform_indices = @transform_2, window_bounds = array<i64: 128, 256>}, {pipeline_mode = #tpu.pipeline_mode<synchronous>, transform_indices = @transform_3, window_bounds = array<i64: 32, 256>}, {pipeline_mode = #tpu.pipeline_mode<synchronous>, transform_indices = @transform_4, window_bounds = array<i64: 32, 256>}, {pipeline_mode = #tpu.pipeline_mode<synchronous>, transform_indices = @transform_5, window_bounds = array<i64: 128, 128>}, {pipeline_mode = #tpu.pipeline_mode<synchronous>, transform_indices = @transform_6, window_bounds = array<i64: 1, 128>}, {pipeline_mode = #tpu.pipeline_mode<synchronous>, transform_indices = @transform_7, window_bounds = array<i64: 128, 512>}, {pipeline_mode = #tpu.pipeline_mode<synchronous>, transform_indices = @transform_8, window_bounds = array<i64: 256, 128>}, {transform_indices = @transform_9, window_bounds = array<i64: 2, 16, 128>}]} {
    %c0 = arith.constant 0 : index
    %c0_0 = arith.constant 0 : index
    %c0_1 = arith.constant 0 : index
    %0 = vector.load %arg1[%c0, %c0_0, %c0_1] : memref<2x16x128xf32, #tpu.memory_space<vmem>>, vector<2x16x128xf32>
    %1 = vector.shape_cast %0 : vector<2x16x128xf32> to vector<32x128xf32>
    %2 = arith.mulf %1, %1 : vector<32x128xf32>
    %cst = arith.constant dense<0.000000e+00> : vector<32xf32>
    %3 = vector.multi_reduction <add>, %2, %cst [1] : vector<32x128xf32> to vector<32xf32>
    %4 = vector.shape_cast %3 : vector<32xf32> to vector<32x1xf32>
    %cst_2 = arith.constant 1.280000e+02 : f32
    %5 = vector.broadcast %cst_2 : f32 to vector<32x1xf32>
    %6 = arith.divf %4, %5 : vector<32x1xf32>
    %cst_3 = arith.constant 9.99999974E-6 : f32
    %7 = vector.broadcast %cst_3 : f32 to vector<32x1xf32>
    %8 = arith.addf %6, %7 : vector<32x1xf32>
    %9 = math.rsqrt %8 : vector<32x1xf32>
    %10 = vector.broadcast %9 : vector<32x1xf32> to vector<32x128xf32>
    %11 = arith.mulf %1, %10 : vector<32x128xf32>
    %c0_4 = arith.constant 0 : index
    %c0_5 = arith.constant 0 : index
    %12 = vector.load %arg2[%c0_4, %c0_5] : memref<1x128xf32, #tpu.memory_space<vmem>>, vector<1x128xf32>
    %13 = vector.broadcast %12 : vector<1x128xf32> to vector<32x128xf32>
    %14 = arith.mulf %11, %13 : vector<32x128xf32>
    %15 = arith.truncf %14 : vector<32x128xf32> to vector<32x128xbf16>
    %c0_6 = arith.constant 0 : index
    %c0_7 = arith.constant 0 : index
    %16 = vector.load %arg3[%c0_6, %c0_7] : memref<128x256xbf16, #tpu.memory_space<vmem>>, vector<128x256xbf16>
    %cst_8 = arith.constant dense<0.000000e+00> : vector<32x256xf32>
    %17 = tpu.matmul %15, %16, %cst_8 {dimension_numbers = #tpu.dot_dimension_numbers<[1], [0], [0], [1], [0, 0, 1, 1], [], []>} : vector<32x128xbf16>, vector<128x256xbf16>, vector<32x256xf32> -> vector<32x256xf32>
    %18 = tpu.iota {dimensions = array<i32: 1>} : vector<32x256xi32>
    %c1_i32 = arith.constant 1 : i32
    %19 = vector.broadcast %c1_i32 : i32 to vector<32x256xi32>
    %20 = arith.andi %18, %19 : vector<32x256xi32>
    %c0_i32 = arith.constant 0 : i32
    %21 = vector.broadcast %c0_i32 : i32 to vector<32x256xi32>
    %22 = arith.cmpi eq, %20, %21 : vector<32x256xi32>
    %c255_i32 = arith.constant 255 : i32
    %23 = tpu.dynamic_rotate %17 by %c255_i32 dim 1 : vector<32x256xf32>, i32 -> vector<32x256xf32>
    %c1_i32_9 = arith.constant 1 : i32
    %24 = tpu.dynamic_rotate %17 by %c1_i32_9 dim 1 : vector<32x256xf32>, i32 -> vector<32x256xf32>
    %25 = arith.select %22, %23, %24 : vector<32x256xi1>, vector<32x256xf32>
    %c0_10 = arith.constant 0 : index
    %c0_11 = arith.constant 0 : index
    %26 = vector.load %arg4[%c0_10, %c0_11] : memref<32x256xf32, #tpu.memory_space<vmem>>, vector<32x256xf32>
    %27 = arith.mulf %17, %26 : vector<32x256xf32>
    %c0_12 = arith.constant 0 : index
    %c0_13 = arith.constant 0 : index
    %28 = vector.load %arg5[%c0_12, %c0_13] : memref<32x256xf32, #tpu.memory_space<vmem>>, vector<32x256xf32>
    %29 = arith.mulf %25, %28 : vector<32x256xf32>
    %30 = arith.addf %27, %29 : vector<32x256xf32>
    %31 = arith.truncf %30 : vector<32x256xf32> to vector<32x256xbf16>
    %32 = tpu.iota {dimensions = array<i32: 0>} : vector<16x16xi32>
    %33 = tpu.iota {dimensions = array<i32: 1>} : vector<16x16xi32>
    %34 = arith.cmpi sle, %33, %32 : vector<16x16xi32>
    %c0_14 = arith.constant 0 : index
    %c0_15 = arith.constant 0 : index
    %35 = vector.load %arg6[%c0_14, %c0_15] : memref<128x128xbf16, #tpu.memory_space<vmem>>, vector<128x128xbf16>
    %cst_16 = arith.constant 0.000000e+00 : f32
    %36 = vector.broadcast %cst_16 : f32 to vector<16x128xf32>
    %37 = vector.extract_strided_slice %31 {offsets = [0, 128], sizes = [16, 32], strides = [1, 1]} : vector<32x256xbf16> to vector<16x32xbf16>
    %38 = vector.extract_strided_slice %31 {offsets = [0, 192], sizes = [16, 32], strides = [1, 1]} : vector<32x256xbf16> to vector<16x32xbf16>
    %39 = vector.extract_strided_slice %31 {offsets = [0, 0], sizes = [16, 32], strides = [1, 1]} : vector<32x256xbf16> to vector<16x32xbf16>
    %cst_17 = arith.constant dense<0.000000e+00> : vector<16x16xf32>
    %40 = tpu.matmul %39, %37, %cst_17 {dimension_numbers = #tpu.dot_dimension_numbers<[1], [1], [0], [0], [0, 0, 1, 0], [], []>} : vector<16x32xbf16>, vector<16x32xbf16>, vector<16x16xf32> -> vector<16x16xf32>
    %cst_18 = arith.constant -1.000000e+30 : f32
    %41 = vector.broadcast %cst_18 : f32 to vector<16x16xf32>
    %42 = arith.select %34, %40, %41 : vector<16x16xi1>, vector<16x16xf32>
    %cst_19 = arith.constant dense<0xFF800000> : vector<16xf32>
    %43 = vector.multi_reduction <maximumf>, %42, %cst_19 [1] : vector<16x16xf32> to vector<16xf32>
    %44 = vector.shape_cast %43 : vector<16xf32> to vector<16x1xf32>
    %45 = vector.broadcast %44 : vector<16x1xf32> to vector<16x16xf32>
    %46 = arith.subf %42, %45 : vector<16x16xf32>
    %47 = math.exp %46 : vector<16x16xf32>
    %cst_20 = arith.constant dense<0.000000e+00> : vector<16xf32>
    %48 = vector.multi_reduction <add>, %47, %cst_20 [1] : vector<16x16xf32> to vector<16xf32>
    %49 = vector.shape_cast %48 : vector<16xf32> to vector<16x1xf32>
    %50 = tpu.reciprocal %49 {approx = true} : vector<16x1xf32> -> vector<16x1xf32>
    %51 = vector.broadcast %50 : vector<16x1xf32> to vector<16x16xf32>
    %52 = arith.mulf %47, %51 : vector<16x16xf32>
    %53 = arith.truncf %52 : vector<16x16xf32> to vector<16x16xbf16>
    %cst_21 = arith.constant dense<0.000000e+00> : vector<16x32xf32>
    %54 = tpu.matmul %53, %38, %cst_21 {dimension_numbers = #tpu.dot_dimension_numbers<[1], [0], [0], [1], [0, 0, 1, 1], [], []>} : vector<16x16xbf16>, vector<16x32xbf16>, vector<16x32xf32> -> vector<16x32xf32>
    %55 = arith.truncf %54 : vector<16x32xf32> to vector<16x32xbf16>
    %56 = vector.extract_strided_slice %35 {offsets = [0, 0], sizes = [32, 128], strides = [1, 1]} : vector<128x128xbf16> to vector<32x128xbf16>
    %cst_22 = arith.constant dense<0.000000e+00> : vector<16x128xf32>
    %57 = tpu.matmul %55, %56, %cst_22 {dimension_numbers = #tpu.dot_dimension_numbers<[1], [0], [0], [1], [0, 0, 1, 1], [], []>} : vector<16x32xbf16>, vector<32x128xbf16>, vector<16x128xf32> -> vector<16x128xf32>
    %58 = arith.addf %36, %57 : vector<16x128xf32>
    %59 = vector.extract_strided_slice %31 {offsets = [0, 32], sizes = [16, 32], strides = [1, 1]} : vector<32x256xbf16> to vector<16x32xbf16>
    %cst_23 = arith.constant dense<0.000000e+00> : vector<16x16xf32>
    %60 = tpu.matmul %59, %37, %cst_23 {dimension_numbers = #tpu.dot_dimension_numbers<[1], [1], [0], [0], [0, 0, 1, 0], [], []>} : vector<16x32xbf16>, vector<16x32xbf16>, vector<16x16xf32> -> vector<16x16xf32>
    %cst_24 = arith.constant -1.000000e+30 : f32
    %61 = vector.broadcast %cst_24 : f32 to vector<16x16xf32>
    %62 = arith.select %34, %60, %61 : vector<16x16xi1>, vector<16x16xf32>
    %cst_25 = arith.constant dense<0xFF800000> : vector<16xf32>
    %63 = vector.multi_reduction <maximumf>, %62, %cst_25 [1] : vector<16x16xf32> to vector<16xf32>
    %64 = vector.shape_cast %63 : vector<16xf32> to vector<16x1xf32>
    %65 = vector.broadcast %64 : vector<16x1xf32> to vector<16x16xf32>
    %66 = arith.subf %62, %65 : vector<16x16xf32>
    %67 = math.exp %66 : vector<16x16xf32>
    %cst_26 = arith.constant dense<0.000000e+00> : vector<16xf32>
    %68 = vector.multi_reduction <add>, %67, %cst_26 [1] : vector<16x16xf32> to vector<16xf32>
    %69 = vector.shape_cast %68 : vector<16xf32> to vector<16x1xf32>
    %70 = tpu.reciprocal %69 {approx = true} : vector<16x1xf32> -> vector<16x1xf32>
    %71 = vector.broadcast %70 : vector<16x1xf32> to vector<16x16xf32>
    %72 = arith.mulf %67, %71 : vector<16x16xf32>
    %73 = arith.truncf %72 : vector<16x16xf32> to vector<16x16xbf16>
    %cst_27 = arith.constant dense<0.000000e+00> : vector<16x32xf32>
    %74 = tpu.matmul %73, %38, %cst_27 {dimension_numbers = #tpu.dot_dimension_numbers<[1], [0], [0], [1], [0, 0, 1, 1], [], []>} : vector<16x16xbf16>, vector<16x32xbf16>, vector<16x32xf32> -> vector<16x32xf32>
    %75 = arith.truncf %74 : vector<16x32xf32> to vector<16x32xbf16>
    %76 = vector.extract_strided_slice %35 {offsets = [32, 0], sizes = [32, 128], strides = [1, 1]} : vector<128x128xbf16> to vector<32x128xbf16>
    %cst_28 = arith.constant dense<0.000000e+00> : vector<16x128xf32>
    %77 = tpu.matmul %75, %76, %cst_28 {dimension_numbers = #tpu.dot_dimension_numbers<[1], [0], [0], [1], [0, 0, 1, 1], [], []>} : vector<16x32xbf16>, vector<32x128xbf16>, vector<16x128xf32> -> vector<16x128xf32>
    %78 = arith.addf %58, %77 : vector<16x128xf32>
    %79 = vector.extract_strided_slice %31 {offsets = [0, 160], sizes = [16, 32], strides = [1, 1]} : vector<32x256xbf16> to vector<16x32xbf16>
    %80 = vector.extract_strided_slice %31 {offsets = [0, 224], sizes = [16, 32], strides = [1, 1]} : vector<32x256xbf16> to vector<16x32xbf16>
    %81 = vector.extract_strided_slice %31 {offsets = [0, 64], sizes = [16, 32], strides = [1, 1]} : vector<32x256xbf16> to vector<16x32xbf16>
    %cst_29 = arith.constant dense<0.000000e+00> : vector<16x16xf32>
    %82 = tpu.matmul %81, %79, %cst_29 {dimension_numbers = #tpu.dot_dimension_numbers<[1], [1], [0], [0], [0, 0, 1, 0], [], []>} : vector<16x32xbf16>, vector<16x32xbf16>, vector<16x16xf32> -> vector<16x16xf32>
    %cst_30 = arith.constant -1.000000e+30 : f32
    %83 = vector.broadcast %cst_30 : f32 to vector<16x16xf32>
    %84 = arith.select %34, %82, %83 : vector<16x16xi1>, vector<16x16xf32>
    %cst_31 = arith.constant dense<0xFF800000> : vector<16xf32>
    %85 = vector.multi_reduction <maximumf>, %84, %cst_31 [1] : vector<16x16xf32> to vector<16xf32>
    %86 = vector.shape_cast %85 : vector<16xf32> to vector<16x1xf32>
    %87 = vector.broadcast %86 : vector<16x1xf32> to vector<16x16xf32>
    %88 = arith.subf %84, %87 : vector<16x16xf32>
    %89 = math.exp %88 : vector<16x16xf32>
    %cst_32 = arith.constant dense<0.000000e+00> : vector<16xf32>
    %90 = vector.multi_reduction <add>, %89, %cst_32 [1] : vector<16x16xf32> to vector<16xf32>
    %91 = vector.shape_cast %90 : vector<16xf32> to vector<16x1xf32>
    %92 = tpu.reciprocal %91 {approx = true} : vector<16x1xf32> -> vector<16x1xf32>
    %93 = vector.broadcast %92 : vector<16x1xf32> to vector<16x16xf32>
    %94 = arith.mulf %89, %93 : vector<16x16xf32>
    %95 = arith.truncf %94 : vector<16x16xf32> to vector<16x16xbf16>
    %cst_33 = arith.constant dense<0.000000e+00> : vector<16x32xf32>
    %96 = tpu.matmul %95, %80, %cst_33 {dimension_numbers = #tpu.dot_dimension_numbers<[1], [0], [0], [1], [0, 0, 1, 1], [], []>} : vector<16x16xbf16>, vector<16x32xbf16>, vector<16x32xf32> -> vector<16x32xf32>
    %97 = arith.truncf %96 : vector<16x32xf32> to vector<16x32xbf16>
    %98 = vector.extract_strided_slice %35 {offsets = [64, 0], sizes = [32, 128], strides = [1, 1]} : vector<128x128xbf16> to vector<32x128xbf16>
    %cst_34 = arith.constant dense<0.000000e+00> : vector<16x128xf32>
    %99 = tpu.matmul %97, %98, %cst_34 {dimension_numbers = #tpu.dot_dimension_numbers<[1], [0], [0], [1], [0, 0, 1, 1], [], []>} : vector<16x32xbf16>, vector<32x128xbf16>, vector<16x128xf32> -> vector<16x128xf32>
    %100 = arith.addf %78, %99 : vector<16x128xf32>
    %101 = vector.extract_strided_slice %31 {offsets = [0, 96], sizes = [16, 32], strides = [1, 1]} : vector<32x256xbf16> to vector<16x32xbf16>
    %cst_35 = arith.constant dense<0.000000e+00> : vector<16x16xf32>
    %102 = tpu.matmul %101, %79, %cst_35 {dimension_numbers = #tpu.dot_dimension_numbers<[1], [1], [0], [0], [0, 0, 1, 0], [], []>} : vector<16x32xbf16>, vector<16x32xbf16>, vector<16x16xf32> -> vector<16x16xf32>
    %cst_36 = arith.constant -1.000000e+30 : f32
    %103 = vector.broadcast %cst_36 : f32 to vector<16x16xf32>
    %104 = arith.select %34, %102, %103 : vector<16x16xi1>, vector<16x16xf32>
    %cst_37 = arith.constant dense<0xFF800000> : vector<16xf32>
    %105 = vector.multi_reduction <maximumf>, %104, %cst_37 [1] : vector<16x16xf32> to vector<16xf32>
    %106 = vector.shape_cast %105 : vector<16xf32> to vector<16x1xf32>
    %107 = vector.broadcast %106 : vector<16x1xf32> to vector<16x16xf32>
    %108 = arith.subf %104, %107 : vector<16x16xf32>
    %109 = math.exp %108 : vector<16x16xf32>
    %cst_38 = arith.constant dense<0.000000e+00> : vector<16xf32>
    %110 = vector.multi_reduction <add>, %109, %cst_38 [1] : vector<16x16xf32> to vector<16xf32>
    %111 = vector.shape_cast %110 : vector<16xf32> to vector<16x1xf32>
    %112 = tpu.reciprocal %111 {approx = true} : vector<16x1xf32> -> vector<16x1xf32>
    %113 = vector.broadcast %112 : vector<16x1xf32> to vector<16x16xf32>
    %114 = arith.mulf %109, %113 : vector<16x16xf32>
    %115 = arith.truncf %114 : vector<16x16xf32> to vector<16x16xbf16>
    %cst_39 = arith.constant dense<0.000000e+00> : vector<16x32xf32>
    %116 = tpu.matmul %115, %80, %cst_39 {dimension_numbers = #tpu.dot_dimension_numbers<[1], [0], [0], [1], [0, 0, 1, 1], [], []>} : vector<16x16xbf16>, vector<16x32xbf16>, vector<16x32xf32> -> vector<16x32xf32>
    %117 = arith.truncf %116 : vector<16x32xf32> to vector<16x32xbf16>
    %118 = vector.extract_strided_slice %35 {offsets = [96, 0], sizes = [32, 128], strides = [1, 1]} : vector<128x128xbf16> to vector<32x128xbf16>
    %cst_40 = arith.constant dense<0.000000e+00> : vector<16x128xf32>
    %119 = tpu.matmul %117, %118, %cst_40 {dimension_numbers = #tpu.dot_dimension_numbers<[1], [0], [0], [1], [0, 0, 1, 1], [], []>} : vector<16x32xbf16>, vector<32x128xbf16>, vector<16x128xf32> -> vector<16x128xf32>
    %120 = arith.addf %100, %119 : vector<16x128xf32>
    %cst_41 = arith.constant 0.000000e+00 : f32
    %121 = vector.broadcast %cst_41 : f32 to vector<16x128xf32>
    %122 = vector.extract_strided_slice %31 {offsets = [16, 128], sizes = [16, 32], strides = [1, 1]} : vector<32x256xbf16> to vector<16x32xbf16>
    %123 = vector.extract_strided_slice %31 {offsets = [16, 192], sizes = [16, 32], strides = [1, 1]} : vector<32x256xbf16> to vector<16x32xbf16>
    %124 = vector.extract_strided_slice %31 {offsets = [16, 0], sizes = [16, 32], strides = [1, 1]} : vector<32x256xbf16> to vector<16x32xbf16>
    %cst_42 = arith.constant dense<0.000000e+00> : vector<16x16xf32>
    %125 = tpu.matmul %124, %122, %cst_42 {dimension_numbers = #tpu.dot_dimension_numbers<[1], [1], [0], [0], [0, 0, 1, 0], [], []>} : vector<16x32xbf16>, vector<16x32xbf16>, vector<16x16xf32> -> vector<16x16xf32>
    %cst_43 = arith.constant -1.000000e+30 : f32
    %126 = vector.broadcast %cst_43 : f32 to vector<16x16xf32>
    %127 = arith.select %34, %125, %126 : vector<16x16xi1>, vector<16x16xf32>
    %cst_44 = arith.constant dense<0xFF800000> : vector<16xf32>
    %128 = vector.multi_reduction <maximumf>, %127, %cst_44 [1] : vector<16x16xf32> to vector<16xf32>
    %129 = vector.shape_cast %128 : vector<16xf32> to vector<16x1xf32>
    %130 = vector.broadcast %129 : vector<16x1xf32> to vector<16x16xf32>
    %131 = arith.subf %127, %130 : vector<16x16xf32>
    %132 = math.exp %131 : vector<16x16xf32>
    %cst_45 = arith.constant dense<0.000000e+00> : vector<16xf32>
    %133 = vector.multi_reduction <add>, %132, %cst_45 [1] : vector<16x16xf32> to vector<16xf32>
    %134 = vector.shape_cast %133 : vector<16xf32> to vector<16x1xf32>
    %135 = tpu.reciprocal %134 {approx = true} : vector<16x1xf32> -> vector<16x1xf32>
    %136 = vector.broadcast %135 : vector<16x1xf32> to vector<16x16xf32>
    %137 = arith.mulf %132, %136 : vector<16x16xf32>
    %138 = arith.truncf %137 : vector<16x16xf32> to vector<16x16xbf16>
    %cst_46 = arith.constant dense<0.000000e+00> : vector<16x32xf32>
    %139 = tpu.matmul %138, %123, %cst_46 {dimension_numbers = #tpu.dot_dimension_numbers<[1], [0], [0], [1], [0, 0, 1, 1], [], []>} : vector<16x16xbf16>, vector<16x32xbf16>, vector<16x32xf32> -> vector<16x32xf32>
    %140 = arith.truncf %139 : vector<16x32xf32> to vector<16x32xbf16>
    %141 = vector.extract_strided_slice %35 {offsets = [0, 0], sizes = [32, 128], strides = [1, 1]} : vector<128x128xbf16> to vector<32x128xbf16>
    %cst_47 = arith.constant dense<0.000000e+00> : vector<16x128xf32>
    %142 = tpu.matmul %140, %141, %cst_47 {dimension_numbers = #tpu.dot_dimension_numbers<[1], [0], [0], [1], [0, 0, 1, 1], [], []>} : vector<16x32xbf16>, vector<32x128xbf16>, vector<16x128xf32> -> vector<16x128xf32>
    %143 = arith.addf %121, %142 : vector<16x128xf32>
    %144 = vector.extract_strided_slice %31 {offsets = [16, 32], sizes = [16, 32], strides = [1, 1]} : vector<32x256xbf16> to vector<16x32xbf16>
    %cst_48 = arith.constant dense<0.000000e+00> : vector<16x16xf32>
    %145 = tpu.matmul %144, %122, %cst_48 {dimension_numbers = #tpu.dot_dimension_numbers<[1], [1], [0], [0], [0, 0, 1, 0], [], []>} : vector<16x32xbf16>, vector<16x32xbf16>, vector<16x16xf32> -> vector<16x16xf32>
    %cst_49 = arith.constant -1.000000e+30 : f32
    %146 = vector.broadcast %cst_49 : f32 to vector<16x16xf32>
    %147 = arith.select %34, %145, %146 : vector<16x16xi1>, vector<16x16xf32>
    %cst_50 = arith.constant dense<0xFF800000> : vector<16xf32>
    %148 = vector.multi_reduction <maximumf>, %147, %cst_50 [1] : vector<16x16xf32> to vector<16xf32>
    %149 = vector.shape_cast %148 : vector<16xf32> to vector<16x1xf32>
    %150 = vector.broadcast %149 : vector<16x1xf32> to vector<16x16xf32>
    %151 = arith.subf %147, %150 : vector<16x16xf32>
    %152 = math.exp %151 : vector<16x16xf32>
    %cst_51 = arith.constant dense<0.000000e+00> : vector<16xf32>
    %153 = vector.multi_reduction <add>, %152, %cst_51 [1] : vector<16x16xf32> to vector<16xf32>
    %154 = vector.shape_cast %153 : vector<16xf32> to vector<16x1xf32>
    %155 = tpu.reciprocal %154 {approx = true} : vector<16x1xf32> -> vector<16x1xf32>
    %156 = vector.broadcast %155 : vector<16x1xf32> to vector<16x16xf32>
    %157 = arith.mulf %152, %156 : vector<16x16xf32>
    %158 = arith.truncf %157 : vector<16x16xf32> to vector<16x16xbf16>
    %cst_52 = arith.constant dense<0.000000e+00> : vector<16x32xf32>
    %159 = tpu.matmul %158, %123, %cst_52 {dimension_numbers = #tpu.dot_dimension_numbers<[1], [0], [0], [1], [0, 0, 1, 1], [], []>} : vector<16x16xbf16>, vector<16x32xbf16>, vector<16x32xf32> -> vector<16x32xf32>
    %160 = arith.truncf %159 : vector<16x32xf32> to vector<16x32xbf16>
    %161 = vector.extract_strided_slice %35 {offsets = [32, 0], sizes = [32, 128], strides = [1, 1]} : vector<128x128xbf16> to vector<32x128xbf16>
    %cst_53 = arith.constant dense<0.000000e+00> : vector<16x128xf32>
    %162 = tpu.matmul %160, %161, %cst_53 {dimension_numbers = #tpu.dot_dimension_numbers<[1], [0], [0], [1], [0, 0, 1, 1], [], []>} : vector<16x32xbf16>, vector<32x128xbf16>, vector<16x128xf32> -> vector<16x128xf32>
    %163 = arith.addf %143, %162 : vector<16x128xf32>
    %164 = vector.extract_strided_slice %31 {offsets = [16, 160], sizes = [16, 32], strides = [1, 1]} : vector<32x256xbf16> to vector<16x32xbf16>
    %165 = vector.extract_strided_slice %31 {offsets = [16, 224], sizes = [16, 32], strides = [1, 1]} : vector<32x256xbf16> to vector<16x32xbf16>
    %166 = vector.extract_strided_slice %31 {offsets = [16, 64], sizes = [16, 32], strides = [1, 1]} : vector<32x256xbf16> to vector<16x32xbf16>
    %cst_54 = arith.constant dense<0.000000e+00> : vector<16x16xf32>
    %167 = tpu.matmul %166, %164, %cst_54 {dimension_numbers = #tpu.dot_dimension_numbers<[1], [1], [0], [0], [0, 0, 1, 0], [], []>} : vector<16x32xbf16>, vector<16x32xbf16>, vector<16x16xf32> -> vector<16x16xf32>
    %cst_55 = arith.constant -1.000000e+30 : f32
    %168 = vector.broadcast %cst_55 : f32 to vector<16x16xf32>
    %169 = arith.select %34, %167, %168 : vector<16x16xi1>, vector<16x16xf32>
    %cst_56 = arith.constant dense<0xFF800000> : vector<16xf32>
    %170 = vector.multi_reduction <maximumf>, %169, %cst_56 [1] : vector<16x16xf32> to vector<16xf32>
    %171 = vector.shape_cast %170 : vector<16xf32> to vector<16x1xf32>
    %172 = vector.broadcast %171 : vector<16x1xf32> to vector<16x16xf32>
    %173 = arith.subf %169, %172 : vector<16x16xf32>
    %174 = math.exp %173 : vector<16x16xf32>
    %cst_57 = arith.constant dense<0.000000e+00> : vector<16xf32>
    %175 = vector.multi_reduction <add>, %174, %cst_57 [1] : vector<16x16xf32> to vector<16xf32>
    %176 = vector.shape_cast %175 : vector<16xf32> to vector<16x1xf32>
    %177 = tpu.reciprocal %176 {approx = true} : vector<16x1xf32> -> vector<16x1xf32>
    %178 = vector.broadcast %177 : vector<16x1xf32> to vector<16x16xf32>
    %179 = arith.mulf %174, %178 : vector<16x16xf32>
    %180 = arith.truncf %179 : vector<16x16xf32> to vector<16x16xbf16>
    %cst_58 = arith.constant dense<0.000000e+00> : vector<16x32xf32>
    %181 = tpu.matmul %180, %165, %cst_58 {dimension_numbers = #tpu.dot_dimension_numbers<[1], [0], [0], [1], [0, 0, 1, 1], [], []>} : vector<16x16xbf16>, vector<16x32xbf16>, vector<16x32xf32> -> vector<16x32xf32>
    %182 = arith.truncf %181 : vector<16x32xf32> to vector<16x32xbf16>
    %183 = vector.extract_strided_slice %35 {offsets = [64, 0], sizes = [32, 128], strides = [1, 1]} : vector<128x128xbf16> to vector<32x128xbf16>
    %cst_59 = arith.constant dense<0.000000e+00> : vector<16x128xf32>
    %184 = tpu.matmul %182, %183, %cst_59 {dimension_numbers = #tpu.dot_dimension_numbers<[1], [0], [0], [1], [0, 0, 1, 1], [], []>} : vector<16x32xbf16>, vector<32x128xbf16>, vector<16x128xf32> -> vector<16x128xf32>
    %185 = arith.addf %163, %184 : vector<16x128xf32>
    %186 = vector.extract_strided_slice %31 {offsets = [16, 96], sizes = [16, 32], strides = [1, 1]} : vector<32x256xbf16> to vector<16x32xbf16>
    %cst_60 = arith.constant dense<0.000000e+00> : vector<16x16xf32>
    %187 = tpu.matmul %186, %164, %cst_60 {dimension_numbers = #tpu.dot_dimension_numbers<[1], [1], [0], [0], [0, 0, 1, 0], [], []>} : vector<16x32xbf16>, vector<16x32xbf16>, vector<16x16xf32> -> vector<16x16xf32>
    %cst_61 = arith.constant -1.000000e+30 : f32
    %188 = vector.broadcast %cst_61 : f32 to vector<16x16xf32>
    %189 = arith.select %34, %187, %188 : vector<16x16xi1>, vector<16x16xf32>
    %cst_62 = arith.constant dense<0xFF800000> : vector<16xf32>
    %190 = vector.multi_reduction <maximumf>, %189, %cst_62 [1] : vector<16x16xf32> to vector<16xf32>
    %191 = vector.shape_cast %190 : vector<16xf32> to vector<16x1xf32>
    %192 = vector.broadcast %191 : vector<16x1xf32> to vector<16x16xf32>
    %193 = arith.subf %189, %192 : vector<16x16xf32>
    %194 = math.exp %193 : vector<16x16xf32>
    %cst_63 = arith.constant dense<0.000000e+00> : vector<16xf32>
    %195 = vector.multi_reduction <add>, %194, %cst_63 [1] : vector<16x16xf32> to vector<16xf32>
    %196 = vector.shape_cast %195 : vector<16xf32> to vector<16x1xf32>
    %197 = tpu.reciprocal %196 {approx = true} : vector<16x1xf32> -> vector<16x1xf32>
    %198 = vector.broadcast %197 : vector<16x1xf32> to vector<16x16xf32>
    %199 = arith.mulf %194, %198 : vector<16x16xf32>
    %200 = arith.truncf %199 : vector<16x16xf32> to vector<16x16xbf16>
    %cst_64 = arith.constant dense<0.000000e+00> : vector<16x32xf32>
    %201 = tpu.matmul %200, %165, %cst_64 {dimension_numbers = #tpu.dot_dimension_numbers<[1], [0], [0], [1], [0, 0, 1, 1], [], []>} : vector<16x16xbf16>, vector<16x32xbf16>, vector<16x32xf32> -> vector<16x32xf32>
    %202 = arith.truncf %201 : vector<16x32xf32> to vector<16x32xbf16>
    %203 = vector.extract_strided_slice %35 {offsets = [96, 0], sizes = [32, 128], strides = [1, 1]} : vector<128x128xbf16> to vector<32x128xbf16>
    %cst_65 = arith.constant dense<0.000000e+00> : vector<16x128xf32>
    %204 = tpu.matmul %202, %203, %cst_65 {dimension_numbers = #tpu.dot_dimension_numbers<[1], [0], [0], [1], [0, 0, 1, 1], [], []>} : vector<16x32xbf16>, vector<32x128xbf16>, vector<16x128xf32> -> vector<16x128xf32>
    %205 = arith.addf %185, %204 : vector<16x128xf32>
    %206 = tpu.concatenate %120, %205 in 0 : vector<16x128xf32>, vector<16x128xf32> -> vector<32x128xf32>
    %207 = arith.addf %1, %206 : vector<32x128xf32>
    %208 = arith.mulf %207, %207 : vector<32x128xf32>
    %cst_66 = arith.constant dense<0.000000e+00> : vector<32xf32>
    %209 = vector.multi_reduction <add>, %208, %cst_66 [1] : vector<32x128xf32> to vector<32xf32>
    %210 = vector.shape_cast %209 : vector<32xf32> to vector<32x1xf32>
    %cst_67 = arith.constant 1.280000e+02 : f32
    %211 = vector.broadcast %cst_67 : f32 to vector<32x1xf32>
    %212 = arith.divf %210, %211 : vector<32x1xf32>
    %cst_68 = arith.constant 9.99999974E-6 : f32
    %213 = vector.broadcast %cst_68 : f32 to vector<32x1xf32>
    %214 = arith.addf %212, %213 : vector<32x1xf32>
    %215 = math.rsqrt %214 : vector<32x1xf32>
    %216 = vector.broadcast %215 : vector<32x1xf32> to vector<32x128xf32>
    %217 = arith.mulf %207, %216 : vector<32x128xf32>
    %c0_69 = arith.constant 0 : index
    %c0_70 = arith.constant 0 : index
    %218 = vector.load %arg7[%c0_69, %c0_70] : memref<1x128xf32, #tpu.memory_space<vmem>>, vector<1x128xf32>
    %219 = vector.broadcast %218 : vector<1x128xf32> to vector<32x128xf32>
    %220 = arith.mulf %217, %219 : vector<32x128xf32>
    %221 = arith.truncf %220 : vector<32x128xf32> to vector<32x128xbf16>
    %c0_71 = arith.constant 0 : index
    %c0_72 = arith.constant 0 : index
    %222 = vector.load %arg8[%c0_71, %c0_72] : memref<128x512xbf16, #tpu.memory_space<vmem>>, vector<128x512xbf16>
    %cst_73 = arith.constant dense<0.000000e+00> : vector<32x512xf32>
    %223 = tpu.matmul %221, %222, %cst_73 {dimension_numbers = #tpu.dot_dimension_numbers<[1], [0], [0], [1], [0, 0, 1, 1], [], []>} : vector<32x128xbf16>, vector<128x512xbf16>, vector<32x512xf32> -> vector<32x512xf32>
    %224 = vector.extract_strided_slice %223 {offsets = [0, 0], sizes = [32, 256], strides = [1, 1]} : vector<32x512xf32> to vector<32x256xf32>
    %225 = vector.extract_strided_slice %223 {offsets = [0, 256], sizes = [32, 256], strides = [1, 1]} : vector<32x512xf32> to vector<32x256xf32>
    %226 = arith.negf %224 : vector<32x256xf32>
    %227 = math.exp %226 : vector<32x256xf32>
    %cst_74 = arith.constant 1.000000e+00 : f32
    %228 = vector.broadcast %cst_74 : f32 to vector<32x256xf32>
    %229 = arith.addf %228, %227 : vector<32x256xf32>
    %230 = arith.divf %228, %229 : vector<32x256xf32>
    %231 = arith.mulf %224, %230 : vector<32x256xf32>
    %232 = arith.mulf %231, %225 : vector<32x256xf32>
    %233 = arith.truncf %232 : vector<32x256xf32> to vector<32x256xbf16>
    %c0_75 = arith.constant 0 : index
    %c0_76 = arith.constant 0 : index
    %234 = vector.load %arg9[%c0_75, %c0_76] : memref<256x128xbf16, #tpu.memory_space<vmem>>, vector<256x128xbf16>
    %cst_77 = arith.constant dense<0.000000e+00> : vector<32x128xf32>
    %235 = tpu.matmul %233, %234, %cst_77 {dimension_numbers = #tpu.dot_dimension_numbers<[1], [0], [0], [1], [0, 0, 1, 1], [], []>} : vector<32x256xbf16>, vector<256x128xbf16>, vector<32x128xf32> -> vector<32x128xf32>
    %236 = arith.addf %207, %235 : vector<32x128xf32>
    %237 = vector.shape_cast %236 : vector<32x128xf32> to vector<2x16x128xf32>
    %c0_78 = arith.constant 0 : index
    %c0_79 = arith.constant 0 : index
    %c0_80 = arith.constant 0 : index
    %238 = vector.load %arg10[%c0_78, %c0_79, %c0_80] : memref<2x16x128xf32, #tpu.memory_space<vmem>>, vector<2x16x128xf32>
    tpu.vector_store %arg10[%c0_78, %c0_79, %c0_80], %237 {strides = array<i32>} : memref<2x16x128xf32, #tpu.memory_space<vmem>>, vector<2x16x128xf32>,
    return
  }
  func.func @transform_0(%arg0: i32) -> (i32, i32, i32) {
    %c0_i32 = arith.constant 0 : i32
    %c0_i32_0 = arith.constant 0 : i32
    %c0_i32_1 = arith.constant 0 : i32
    return %arg0, %c0_i32, %c0_i32_0 : i32, i32, i32
  }
  func.func @transform_1(%arg0: i32) -> (i32, i32) {
    %c0_i32 = arith.constant 0 : i32
    %c0_i32_0 = arith.constant 0 : i32
    %c0_i32_1 = arith.constant 0 : i32
    return %c0_i32, %c0_i32_0 : i32, i32
  }
  func.func @transform_2(%arg0: i32) -> (i32, i32) {
    %c0_i32 = arith.constant 0 : i32
    %c0_i32_0 = arith.constant 0 : i32
    %c0_i32_1 = arith.constant 0 : i32
    return %c0_i32, %c0_i32_0 : i32, i32
  }
  func.func @transform_3(%arg0: i32) -> (i32, i32) {
    %c0_i32 = arith.constant 0 : i32
    %c0_i32_0 = arith.constant 0 : i32
    %c0_i32_1 = arith.constant 0 : i32
    return %c0_i32, %c0_i32_0 : i32, i32
  }
  func.func @transform_4(%arg0: i32) -> (i32, i32) {
    %c0_i32 = arith.constant 0 : i32
    %c0_i32_0 = arith.constant 0 : i32
    %c0_i32_1 = arith.constant 0 : i32
    return %c0_i32, %c0_i32_0 : i32, i32
  }
  func.func @transform_5(%arg0: i32) -> (i32, i32) {
    %c0_i32 = arith.constant 0 : i32
    %c0_i32_0 = arith.constant 0 : i32
    %c0_i32_1 = arith.constant 0 : i32
    return %c0_i32, %c0_i32_0 : i32, i32
  }
  func.func @transform_6(%arg0: i32) -> (i32, i32) {
    %c0_i32 = arith.constant 0 : i32
    %c0_i32_0 = arith.constant 0 : i32
    %c0_i32_1 = arith.constant 0 : i32
    return %c0_i32, %c0_i32_0 : i32, i32
  }
  func.func @transform_7(%arg0: i32) -> (i32, i32) {
    %c0_i32 = arith.constant 0 : i32
    %c0_i32_0 = arith.constant 0 : i32
    %c0_i32_1 = arith.constant 0 : i32
    return %c0_i32, %c0_i32_0 : i32, i32
  }
  func.func @transform_8(%arg0: i32) -> (i32, i32) {
    %c0_i32 = arith.constant 0 : i32
    %c0_i32_0 = arith.constant 0 : i32
    %c0_i32_1 = arith.constant 0 : i32
    return %c0_i32, %c0_i32_0 : i32, i32
  }
  func.func @transform_9(%arg0: i32) -> (i32, i32, i32) {
    %c0_i32 = arith.constant 0 : i32
    %c0_i32_0 = arith.constant 0 : i32
    %c0_i32_1 = arith.constant 0 : i32
    return %arg0, %c0_i32, %c0_i32_0 : i32, i32, i32
  }
}

</mosaic_0001>

<llo_original>
// kernel: tpu_custom_call.1
$region0: #{tpu_custom_call.1}
  #allocation0 [shape = 'u32[]', space=smem, size = 0x4, offset = 0x4, fixed_abs, tag = 'smem constant byte address 0x4 - core index']
  #allocation1 [shape = 'u32[72,128]{1,0:T(1,128)}', space=vmem, size = 0x9000, scoped, tag = 'internal scratch']
  %s0 = inlined_call_operand.hbm [shape: f32[4,16,128], index: 0, kind: input, shape index: {}]
  %s1 = inlined_call_operand.hbm [shape: f32[1,128], index: 1, kind: input, shape index: {}]
  %s2 = inlined_call_operand.hbm [shape: bf16[128,256], index: 2, kind: input, shape index: {}]
  %s3 = inlined_call_operand.hbm [shape: f32[32,256], index: 3, kind: input, shape index: {}]
  %s4 = inlined_call_operand.hbm [shape: f32[32,256], index: 4, kind: input, shape index: {}]
  %s5 = inlined_call_operand.hbm [shape: bf16[128,128], index: 5, kind: input, shape index: {}]
  %s6 = inlined_call_operand.vmem [shape: f32[1,128], index: 6, kind: input, shape index: {}]
  %s7 = inlined_call_operand.hbm [shape: bf16[128,512], index: 7, kind: input, shape index: {}]
  %s8 = inlined_call_operand.hbm [shape: bf16[256,128], index: 8, kind: input, shape index: {}]
  %s9 = inlined_call_operand.hbm [shape: f32[4,16,128], index: 9, kind: output, shape index: {}]
  %s10 = sld [smem:[#allocation0]]
  $region101: #{tpu_custom_call.1} parent=0
    _
  %s12 = ssub.s32 1, %s10
  %s13 = scalar_select 0, %s12, %s10
  $region1: #{tpu_custom_call.1} parent=0
    #allocation2 [shape = 'u8[32768]{0}', space=vmem, size = 0x8000, scoped, tag = 'input window, operand 0']
    #allocation3 [shape = 's32[2]{0}', space=sflag, size = 0x8, scoped, tag = 'scoped memory for tpu_custom_call.1']
    #allocation4 [shape = 's32[2]{0}', space=sflag, size = 0x8, scoped, tag = 'scoped memory for tpu_custom_call.1']
    #allocation5 [shape = 'u8[512]{0}', space=vmem, size = 0x400, scoped, tag = 'input window, operand 1, single buffered']
    #allocation6 [shape = 's32[1]{0}', space=sflag, size = 0x4, scoped, tag = 'scoped memory for tpu_custom_call.1']
    #allocation7 [shape = 'u8[65536]{0}', space=vmem, size = 0x10000, scoped, tag = 'input window, operand 2, single buffered']
    #allocation8 [shape = 'u8[32768]{0}', space=vmem, size = 0x8000, scoped, tag = 'input window, operand 3, single buffered']
    #allocation9 [shape = 's32[1]{0}', space=sflag, size = 0x4, scoped, tag = 'scoped memory for tpu_custom_call.1']
    #allocation10 [shape = 'u8[32768]{0}', space=vmem, size = 0x8000, scoped, tag = 'input window, operand 4, single buffered']
    #allocation11 [shape = 'u8[32768]{0}', space=vmem, size = 0x8000, scoped, tag = 'input window, operand 5, single buffered']
    #allocation12 [shape = 's32[1]{0}', space=sflag, size = 0x4, scoped, tag = 'scoped memory for tpu_custom_call.1']
    #allocation13 [shape = 'u8[131072]{0}', space=vmem, size = 0x20000, scoped, tag = 'input window, operand 7, single buffered']
    #allocation14 [shape = 'u8[65536]{0}', space=vmem, size = 0x10000, scoped, tag = 'input window, operand 8, single buffered']
    #allocation15 [shape = 's32[1]{0}', space=sflag, size = 0x4, scoped, tag = 'scoped memory for tpu_custom_call.1']
    #allocation16 [shape = 'u8[32768]{0}', space=vmem, size = 0x8000, scoped, tag = 'output window, operand 0']
    %14 = vsyncpa [#allocation3], 0
    %s15 = scalar_lea.sflag [#allocation3], 1
    %16 = vsyncpa %s15, 0
    %17 = vsyncpa [#allocation6], 0
    %18 = vsyncpa [#allocation9], 0
    %19 = vsyncpa [#allocation12], 0
    %20 = vsyncpa [#allocation15], 0
    %21 = vsyncpa [#allocation4], 0
    %s22 = scalar_lea.sflag [#allocation4], 1
    %23 = vsyncpa %s22, 0
    loop: start=0, step=1, limit=4
    $region2: #{tpu_custom_call.1} parent=1 // loop_pre_header
      _
    $region3: #{tpu_custom_call.1} parent=1 // loop_header
      %s25 = sphi 0, %s29
      %p26 = scmp.ge.s32.totalorder %s25, 4
      %s35 = sphi 0, %s37
      %s38 = sphi 0, %s35
      %s39 = sphi 0, %s38
      %s55 = sphi 0, %s39
      %s59 = sphi 0, %s59
      %s61 = sphi 0, %s59
      %s62 = sphi 0, %s61
      %s76 = sphi 0, %s62
      %s80 = sphi 0, %s80
      %s82 = sphi 0, %s80
      %s83 = sphi 0, %s82
      %s97 = sphi 0, %s83
      %s101 = sphi 0, %s101
      %s103 = sphi 0, %s101
      %s104 = sphi 0, %s103
      %s118 = sphi 0, %s104
      %s122 = sphi 0, %s122
      %s124 = sphi 0, %s122
      %s125 = sphi 0, %s124
      %s139 = sphi 0, %s125
      %s143 = sphi 0, %s143
      %s145 = sphi 0, %s143
      %s146 = sphi 0, %s145
      %s160 = sphi 0, %s146
      %s164 = sphi 0, %s164
      %s166 = sphi 0, %s164
      %s167 = sphi 0, %s166
      %s181 = sphi 0, %s167
      %s185 = sphi 0, %s185
      %s187 = sphi 0, %s185
      %s188 = sphi 0, %s187
      %s202 = sphi 0, %s188
      %s206 = sphi 0, %s206
      %s208 = sphi 0, %s206
      %s209 = sphi 0, %s208
      %s223 = sphi 0, %s209
      %s229 = sphi 0, %s231
      %s232 = sphi 0, %s229
      %s233 = sphi 0, %s232
      %s249 = sphi 0, %s233
    $region4: #{tpu_custom_call.1} parent=1 // loop_header_branch
      %28 = sbr.rel (%p26) target = $region8
    $region5: #{tpu_custom_call.1} parent=1 // loop_body
      %s30 = ssub.s32 %s25, 1
      %s31 = ssub.s32 %s25, 2
      %s32 = sadd.s32 %s25, 1
      %s33 = ssub.s32 %s25, %s32
      %p34 = scmp.eq.s32.totalorder %s33, 0
      %s36 = sadd.s32 %s35, 1
      %s37 = scalar_select %p34, %s35, %s36
      %p40 = pneg %p34
      %p41 = scmp.eq.s32.totalorder %s25, 1
      %p42 = por %p40, %p41
      %p43 = scmp.ne.s32.totalorder %s35, %s38
      %p44 = scmp.eq.s32.totalorder %s25, 0
      %p45 = por %p43, %p44
      %p46 = scmp.ne.s32.totalorder %s35, %s38
      %p47 = scmp.eq.s32.totalorder %s30, 1
      %p48 = por %p46, %p47
      %p49 = scmp.ne.s32.totalorder %s38, %s39
      %p50 = scmp.eq.s32.totalorder %s30, 0
      %p51 = por %p49, %p50
      %p52 = scmp.ne.s32.totalorder %s38, %s39
      %p53 = scmp.eq.s32.totalorder %s31, 1
      %p54 = por %p52, %p53
      %p56 = scmp.ne.s32.totalorder %s39, %s55
      %p57 = scmp.eq.s32.totalorder %s31, 0
      %p58 = por %p56, %p57
      %s60 = sadd.s32 %s59, 1
      %p63 = scmp.eq.s32.totalorder %s25, 1
      %p64 = scmp.ne.s32.totalorder %s59, %s61
      %p65 = scmp.eq.s32.totalorder %s25, 0
      %p66 = por %p64, %p65
      %p67 = scmp.ne.s32.totalorder %s59, %s61
      %p68 = scmp.eq.s32.totalorder %s30, 1
      %p69 = por %p67, %p68
      %p70 = scmp.ne.s32.totalorder %s61, %s62
      %p71 = scmp.eq.s32.totalorder %s30, 0
      %p72 = por %p70, %p71
      %p73 = scmp.ne.s32.totalorder %s61, %s62
      %p74 = scmp.eq.s32.totalorder %s31, 1
      %p75 = por %p73, %p74
      %p77 = scmp.ne.s32.totalorder %s62, %s76
      %p78 = scmp.eq.s32.totalorder %s31, 0
      %p79 = por %p77, %p78
      %s81 = sadd.s32 %s80, 1
      %p84 = scmp.eq.s32.totalorder %s25, 1
      %p85 = scmp.ne.s32.totalorder %s80, %s82
      %p86 = scmp.eq.s32.totalorder %s25, 0
      %p87 = por %p85, %p86
      %p88 = scmp.ne.s32.totalorder %s80, %s82
      %p89 = scmp.eq.s32.totalorder %s30, 1
      %p90 = por %p88, %p89
      %p91 = scmp.ne.s32.totalorder %s82, %s83
      %p92 = scmp.eq.s32.totalorder %s30, 0
      %p93 = por %p91, %p92
      %p94 = scmp.ne.s32.totalorder %s82, %s83
      %p95 = scmp.eq.s32.totalorder %s31, 1
      %p96 = por %p94, %p95
      %p98 = scmp.ne.s32.totalorder %s83, %s97
      %p99 = scmp.eq.s32.totalorder %s31, 0
      %p100 = por %p98, %p99
      %s102 = sadd.s32 %s101, 1
      %p105 = scmp.eq.s32.totalorder %s25, 1
      %p106 = scmp.ne.s32.totalorder %s101, %s103
      %p107 = scmp.eq.s32.totalorder %s25, 0
      %p108 = por %p106, %p107
      %p109 = scmp.ne.s32.totalorder %s101, %s103
      %p110 = scmp.eq.s32.totalorder %s30, 1
      %p111 = por %p109, %p110
      %p112 = scmp.ne.s32.totalorder %s103, %s104
      %p113 = scmp.eq.s32.totalorder %s30, 0
      %p114 = por %p112, %p113
      %p115 = scmp.ne.s32.totalorder %s103, %s104
      %p116 = scmp.eq.s32.totalorder %s31, 1
      %p117 = por %p115, %p116
      %p119 = scmp.ne.s32.totalorder %s104, %s118
      %p120 = scmp.eq.s32.totalorder %s31, 0
      %p121 = por %p119, %p120
      %s123 = sadd.s32 %s122, 1
      %p126 = scmp.eq.s32.totalorder %s25, 1
      %p127 = scmp.ne.s32.totalorder %s122, %s124
      %p128 = scmp.eq.s32.totalorder %s25, 0
      %p129 = por %p127, %p128
      %p130 = scmp.ne.s32.totalorder %s122, %s124
      %p131 = scmp.eq.s32.totalorder %s30, 1
      %p132 = por %p130, %p131
      %p133 = scmp.ne.s32.totalorder %s124, %s125
      %p134 = scmp.eq.s32.totalorder %s30, 0
      %p135 = por %p133, %p134
      %p136 = scmp.ne.s32.totalorder %s124, %s125
      %p137 = scmp.eq.s32.totalorder %s31, 1
      %p138 = por %p136, %p137
      %p140 = scmp.ne.s32.totalorder %s125, %s139
      %p141 = scmp.eq.s32.totalorder %s31, 0
      %p142 = por %p140, %p141
      %s144 = sadd.s32 %s143, 1
      %p147 = scmp.eq.s32.totalorder %s25, 1
      %p148 = scmp.ne.s32.totalorder %s143, %s145
      %p149 = scmp.eq.s32.totalorder %s25, 0
      %p150 = por %p148, %p149
      %p151 = scmp.ne.s32.totalorder %s143, %s145
      %p152 = scmp.eq.s32.totalorder %s30, 1
      %p153 = por %p151, %p152
      %p154 = scmp.ne.s32.totalorder %s145, %s146
      %p155 = scmp.eq.s32.totalorder %s30, 0
      %p156 = por %p154, %p155
      %p157 = scmp.ne.s32.totalorder %s145, %s146
      %p158 = scmp.eq.s32.totalorder %s31, 1
      %p159 = por %p157, %p158
      %p161 = scmp.ne.s32.totalorder %s146, %s160
      %p162 = scmp.eq.s32.totalorder %s31, 0
      %p163 = por %p161, %p162
      %s165 = sadd.s32 %s164, 1
      %p168 = scmp.eq.s32.totalorder %s25, 1
      %p169 = scmp.ne.s32.totalorder %s164, %s166
      %p170 = scmp.eq.s32.totalorder %s25, 0
      %p171 = por %p169, %p170
      %p172 = scmp.ne.s32.totalorder %s164, %s166
      %p173 = scmp.eq.s32.totalorder %s30, 1
      %p174 = por %p172, %p173
      %p175 = scmp.ne.s32.totalorder %s166, %s167
      %p176 = scmp.eq.s32.totalorder %s30, 0
      %p177 = por %p175, %p176
      %p178 = scmp.ne.s32.totalorder %s166, %s167
      %p179 = scmp.eq.s32.totalorder %s31, 1
      %p180 = por %p178, %p179
      %p182 = scmp.ne.s32.totalorder %s167, %s181
      %p183 = scmp.eq.s32.totalorder %s31, 0
      %p184 = por %p182, %p183
      %s186 = sadd.s32 %s185, 1
      %p189 = scmp.eq.s32.totalorder %s25, 1
      %p190 = scmp.ne.s32.totalorder %s185, %s187
      %p191 = scmp.eq.s32.totalorder %s25, 0
      %p192 = por %p190, %p191
      %p193 = scmp.ne.s32.totalorder %s185, %s187
      %p194 = scmp.eq.s32.totalorder %s30, 1
      %p195 = por %p193, %p194
      %p196 = scmp.ne.s32.totalorder %s187, %s188
      %p197 = scmp.eq.s32.totalorder %s30, 0
      %p198 = por %p196, %p197
      %p199 = scmp.ne.s32.totalorder %s187, %s188
      %p200 = scmp.eq.s32.totalorder %s31, 1
      %p201 = por %p199, %p200
      %p203 = scmp.ne.s32.totalorder %s188, %s202
      %p204 = scmp.eq.s32.totalorder %s31, 0
      %p205 = por %p203, %p204
      %s207 = sadd.s32 %s206, 1
      %p210 = scmp.eq.s32.totalorder %s25, 1
      %p211 = scmp.ne.s32.totalorder %s206, %s208
      %p212 = scmp.eq.s32.totalorder %s25, 0
      %p213 = por %p211, %p212
      %p214 = scmp.ne.s32.totalorder %s206, %s208
      %p215 = scmp.eq.s32.totalorder %s30, 1
      %p216 = por %p214, %p215
      %p217 = scmp.ne.s32.totalorder %s208, %s209
      %p218 = scmp.eq.s32.totalorder %s30, 0
      %p219 = por %p217, %p218
      %p220 = scmp.ne.s32.totalorder %s208, %s209
      %p221 = scmp.eq.s32.totalorder %s31, 1
      %p222 = por %p220, %p221
      %p224 = scmp.ne.s32.totalorder %s209, %s223
      %p225 = scmp.eq.s32.totalorder %s31, 0
      %p226 = por %p224, %p225
      %s227 = ssub.s32 %s25, %s32
      %p228 = scmp.eq.s32.totalorder %s227, 0
      %s230 = sadd.s32 %s229, 1
      %s231 = scalar_select %p228, %s229, %s230
      %p234 = pneg %p228
      %p235 = scmp.eq.s32.totalorder %s25, 1
      %p236 = por %p234, %p235
      %p237 = scmp.ne.s32.totalorder %s229, %s232
      %p238 = scmp.eq.s32.totalorder %s25, 0
      %p239 = por %p237, %p238
      %p240 = scmp.ne.s32.totalorder %s229, %s232
      %p241 = scmp.eq.s32.totalorder %s30, 1
      %p242 = por %p240, %p241
      %p243 = scmp.ne.s32.totalorder %s232, %s233
      %p244 = scmp.eq.s32.totalorder %s30, 0
      %p245 = por %p243, %p244
      %p246 = scmp.ne.s32.totalorder %s232, %s233
      %p247 = scmp.eq.s32.totalorder %s31, 1
      %p248 = por %p246, %p247
      %p250 = scmp.ne.s32.totalorder %s233, %s249
      %p251 = scmp.eq.s32.totalorder %s31, 0
      %p252 = por %p250, %p251
      %p253 = scmp.le.s32.totalorder 1, %s25
      %p254 = scmp.lt.s32.totalorder %s25, 3
      %p255 = pnand %p253, %p254
      %p256 = pneg %p255
      // Predicated region
      $region9: #{tpu_custom_call.1} parent=5 // pred_check
        _
      $region10: #{tpu_custom_call.1} parent=5 // pred_check_branch
        %258 = sbr.rel (%p255) target = $region12
      $region11: #{tpu_custom_call.1} parent=5 // pred_region
        %s259 = ssub.s32 %s25, 1
        // Predicated region
        $region13: #{tpu_custom_call.1} parent=11 // pred_check
          %p260 = pneg %p72
        $region14: #{tpu_custom_call.1} parent=11 // pred_check_branch
          %262 = sbr.rel (%p260) target = $region16
        $region15: #{tpu_custom_call.1} parent=11 // pred_region
          %264 = vsyncadd [#allocation6], 0
          %s266 = sshll.u32 %s1, 4
          %s267 = int_to_ptr.hbm [resolvable:$true] %s266
          %s268 = sshll.u32 [#allocation5], 4
          %s269 = int_to_ptr.vmem [resolvable:$true] %s268
          %271 = dma.hbm_to_vmem [thread:$0]  %s267, 16, %s269, [#allocation6]
        $region16: #{tpu_custom_call.1} parent=11 // pred_fallthru
          _
        // Predicated region
        $region17: #{tpu_custom_call.1} parent=11 // pred_check
          %p272 = pneg %p93
        $region18: #{tpu_custom_call.1} parent=11 // pred_check_branch
          %274 = sbr.rel (%p272) target = $region20
        $region19: #{tpu_custom_call.1} parent=11 // pred_region
          %276 = vsyncadd [#allocation6], 0
          %s277 = sshll.u32 %s2, 4
          %s278 = int_to_ptr.hbm [resolvable:$true] %s277
          %s279 = sshll.u32 [#allocation7], 4
          %s280 = int_to_ptr.vmem [resolvable:$true] %s279
          %285 = dma.hbm_to_vmem [thread:$0]  %s278, 2048, %s280, [#allocation6], 128, 128, 8
        $region20: #{tpu_custom_call.1} parent=11 // pred_fallthru
          _
        // Predicated region
        $region21: #{tpu_custom_call.1} parent=11 // pred_check
          %p286 = pneg %p114
        $region22: #{tpu_custom_call.1} parent=11 // pred_check_branch
          %288 = sbr.rel (%p286) target = $region24
        $region23: #{tpu_custom_call.1} parent=11 // pred_region
          %290 = vsyncadd [#allocation9], 0
          %s291 = sshll.u32 %s3, 4
          %s292 = int_to_ptr.hbm [resolvable:$true] %s291
          %s293 = sshll.u32 [#allocation8], 4
          %s294 = int_to_ptr.vmem [resolvable:$true] %s293
          %299 = dma.hbm_to_vmem [thread:$0]  %s292, 1024, %s294, [#allocation9], 256, 256, 16
        $region24: #{tpu_custom_call.1} parent=11 // pred_fallthru
          _
        // Predicated region
        $region25: #{tpu_custom_call.1} parent=11 // pred_check
          %p300 = pneg %p135
        $region26: #{tpu_custom_call.1} parent=11 // pred_check_branch
          %302 = sbr.rel (%p300) target = $region28
        $region27: #{tpu_custom_call.1} parent=11 // pred_region
          %304 = vsyncadd [#allocation9], 0
          %s305 = sshll.u32 %s4, 4
          %s306 = int_to_ptr.hbm [resolvable:$true] %s305
          %s307 = sshll.u32 [#allocation10], 4
          %s308 = int_to_ptr.vmem [resolvable:$true] %s307
          %313 = dma.hbm_to_vmem [thread:$0]  %s306, 1024, %s308, [#allocation9], 256, 256, 16
        $region28: #{tpu_custom_call.1} parent=11 // pred_fallthru
          _
        // Predicated region
        $region29: #{tpu_custom_call.1} parent=11 // pred_check
          %p314 = pneg %p156
        $region30: #{tpu_custom_call.1} parent=11 // pred_check_branch
          %316 = sbr.rel (%p314) target = $region32
        $region31: #{tpu_custom_call.1} parent=11 // pred_region
          %318 = vsyncadd [#allocation12], 0
          %s319 = sshll.u32 %s5, 4
          %s320 = int_to_ptr.hbm [resolvable:$true] %s319
          %s321 = sshll.u32 [#allocation11], 4
          %s322 = int_to_ptr.vmem [resolvable:$true] %s321
          %327 = dma.hbm_to_vmem [thread:$0]  %s320, 1024, %s322, [#allocation12], 64, 64, 4
        $region32: #{tpu_custom_call.1} parent=11 // pred_fallthru
          _
        // Predicated region
        $region33: #{tpu_custom_call.1} parent=11 // pred_check
          %p328 = pneg %p177
        $region34: #{tpu_custom_call.1} parent=11 // pred_check_branch
          %330 = sbr.rel (%p328) target = $region36
        $region35: #{tpu_custom_call.1} parent=11 // pred_region
          _
        $region36: #{tpu_custom_call.1} parent=11 // pred_fallthru
          _
        // Predicated region
        $region37: #{tpu_custom_call.1} parent=11 // pred_check
          %p331 = pneg %p198
        $region38: #{tpu_custom_call.1} parent=11 // pred_check_branch
          %333 = sbr.rel (%p331) target = $region40
        $region39: #{tpu_custom_call.1} parent=11 // pred_region
          %335 = vsyncadd [#allocation12], 0
          %s336 = sshll.u32 %s7, 4
          %s337 = int_to_ptr.hbm [resolvable:$true] %s336
          %s338 = sshll.u32 [#allocation13], 4
          %s339 = int_to_ptr.vmem [resolvable:$true] %s338
          %344 = dma.hbm_to_vmem [thread:$0]  %s337, 4096, %s339, [#allocation12], 256, 256, 16
        $region40: #{tpu_custom_call.1} parent=11 // pred_fallthru
          _
        // Predicated region
        $region41: #{tpu_custom_call.1} parent=11 // pred_check
          %p345 = pneg %p219
        $region42: #{tpu_custom_call.1} parent=11 // pred_check_branch
          %347 = sbr.rel (%p345) target = $region44
        $region43: #{tpu_custom_call.1} parent=11 // pred_region
          %349 = vsyncadd [#allocation15], 0
          %s350 = sshll.u32 %s8, 4
          %s351 = int_to_ptr.hbm [resolvable:$true] %s350
          %s352 = sshll.u32 [#allocation14], 4
          %s353 = int_to_ptr.vmem [resolvable:$true] %s352
          %358 = dma.hbm_to_vmem [thread:$0]  %s351, 2048, %s353, [#allocation15], 64, 64, 4
        $region44: #{tpu_custom_call.1} parent=11 // pred_fallthru
          _
      $region12: #{tpu_custom_call.1} parent=5 // pred_fallthru
        _
      %p359 = scmp.lt.s32.totalorder %s25, 2
      // Predicated region
      $region45: #{tpu_custom_call.1} parent=5 // pred_check
        %p360 = pneg %p359
      $region46: #{tpu_custom_call.1} parent=5 // pred_check_branch
        %362 = sbr.rel (%p360) target = $region48
      $region47: #{tpu_custom_call.1} parent=5 // pred_region
        // Predicated region
        $region49: #{tpu_custom_call.1} parent=47 // pred_check
          %p363 = pneg %p45
        $region50: #{tpu_custom_call.1} parent=47 // pred_check_branch
          %365 = sbr.rel (%p363) target = $region52
        $region51: #{tpu_custom_call.1} parent=47 // pred_region
          %s366 = sand.u32 %s35, 1
          %s367 = scalar_lea.sflag [#allocation3], %s366
          %s368 = sand.u32 %s35, 1
          %s369 = smul.addr %s368, 32
          %s370 = scalar_lea.vmem [#allocation2], %s369
          %s371 = smul.u32 2, %s25
          %373 = vsyncadd %s367, 0
          %s374 = smul.addr %s371, 2
          %s375 = smul.addr %s374, 8
          %s376 = scalar_lea.hbm %s0, %s375
          %s377 = sshll.u32 %s376, 4
          %s378 = int_to_ptr.hbm [resolvable:$true] %s377
          %s379 = sshll.u32 %s370, 4
          %s380 = int_to_ptr.vmem [resolvable:$true] %s379
          %385 = dma.hbm_to_vmem [thread:$0]  %s378, 512, %s380, %s367, 128, 128, 8
        $region52: #{tpu_custom_call.1} parent=47 // pred_fallthru
          _
      $region48: #{tpu_custom_call.1} parent=5 // pred_fallthru
        _
      %p386 = scmp.le.s32.totalorder 1, %s25
      %p387 = scmp.lt.s32.totalorder %s25, 3
      %p388 = pnand %p386, %p387
      %p389 = pneg %p388
      // Predicated region
      $region53: #{tpu_custom_call.1} parent=5 // pred_check
        _
      $region54: #{tpu_custom_call.1} parent=5 // pred_check_branch
        %391 = sbr.rel (%p388) target = $region56
      $region55: #{tpu_custom_call.1} parent=5 // pred_region
        %s392 = ssub.s32 %s25, 1
        %s393 = sand.u32 %s38, 1
        %s394 = scalar_lea.sflag [#allocation3], %s393
        %s395 = sand.u32 %s38, 1
        %s396 = smul.addr %s395, 32
        %s397 = scalar_lea.vmem [#allocation2], %s396
        // Predicated region
        $region57: #{tpu_custom_call.1} parent=55 // pred_check
          %p398 = pneg %p51
        $region58: #{tpu_custom_call.1} parent=55 // pred_check_branch
          %400 = sbr.rel (%p398) target = $region60
        $region59: #{tpu_custom_call.1} parent=55 // pred_region
          %402 = dma.done %s394, 512
        $region60: #{tpu_custom_call.1} parent=55 // pred_fallthru
          _
        // Predicated region
        $region61: #{tpu_custom_call.1} parent=55 // pred_check
          %p403 = pneg %p72
        $region62: #{tpu_custom_call.1} parent=55 // pred_check_branch
          %405 = sbr.rel (%p403) target = $region64
        $region63: #{tpu_custom_call.1} parent=55 // pred_region
          %407 = dma.done [#allocation6], 16
        $region64: #{tpu_custom_call.1} parent=55 // pred_fallthru
          _
        // Predicated region
        $region65: #{tpu_custom_call.1} parent=55 // pred_check
          %p408 = pneg %p93
        $region66: #{tpu_custom_call.1} parent=55 // pred_check_branch
          %410 = sbr.rel (%p408) target = $region68
        $region67: #{tpu_custom_call.1} parent=55 // pred_region
          %412 = dma.done [#allocation6], 2048
        $region68: #{tpu_custom_call.1} parent=55 // pred_fallthru
          _
        // Predicated region
        $region69: #{tpu_custom_call.1} parent=55 // pred_check
          %p413 = pneg %p114
        $region70: #{tpu_custom_call.1} parent=55 // pred_check_branch
          %415 = sbr.rel (%p413) target = $region72
        $region71: #{tpu_custom_call.1} parent=55 // pred_region
          %417 = dma.done [#allocation9], 1024
        $region72: #{tpu_custom_call.1} parent=55 // pred_fallthru
          _
        // Predicated region
        $region73: #{tpu_custom_call.1} parent=55 // pred_check
          %p418 = pneg %p135
        $region74: #{tpu_custom_call.1} parent=55 // pred_check_branch
          %420 = sbr.rel (%p418) target = $region76
        $region75: #{tpu_custom_call.1} parent=55 // pred_region
          %422 = dma.done [#allocation9], 1024
        $region76: #{tpu_custom_call.1} parent=55 // pred_fallthru
          _
        // Predicated region
        $region77: #{tpu_custom_call.1} parent=55 // pred_check
          %p423 = pneg %p156
        $region78: #{tpu_custom_call.1} parent=55 // pred_check_branch
          %425 = sbr.rel (%p423) target = $region80
        $region79: #{tpu_custom_call.1} parent=55 // pred_region
          %427 = dma.done [#allocation12], 1024
        $region80: #{tpu_custom_call.1} parent=55 // pred_fallthru
          _
        // Predicated region
        $region81: #{tpu_custom_call.1} parent=55 // pred_check
          %p428 = pneg %p198
        $region82: #{tpu_custom_call.1} parent=55 // pred_check_branch
          %430 = sbr.rel (%p428) target = $region84
        $region83: #{tpu_custom_call.1} parent=55 // pred_region
          %432 = dma.done [#allocation12], 4096
        $region84: #{tpu_custom_call.1} parent=55 // pred_fallthru
          _
        // Predicated region
        $region85: #{tpu_custom_call.1} parent=55 // pred_check
          %p433 = pneg %p219
        $region86: #{tpu_custom_call.1} parent=55 // pred_check_branch
          %435 = sbr.rel (%p433) target = $region88
        $region87: #{tpu_custom_call.1} parent=55 // pred_region
          %437 = dma.done [#allocation15], 2048
        $region88: #{tpu_custom_call.1} parent=55 // pred_fallthru
          _
        %s438 = sand.u32 %s38, 1
        %s439 = scalar_lea.sflag [#allocation3], %s438
        %s440 = sand.u32 %s38, 1
        %s441 = smul.addr %s440, 32
        %s442 = scalar_lea.vmem [#allocation2], %s441
        %p443 = pneg %p51
        %p444 = pneg %p48
        %p445 = pneg %p72
        %p446 = pneg %p69
        %p447 = pneg %p93
        %p448 = pneg %p90
        %p449 = pneg %p114
        %p450 = pneg %p111
        %p451 = pneg %p135
        %p452 = pneg %p132
        %p453 = pneg %p156
        %p454 = pneg %p153
        %p455 = pneg %p177
        %p456 = pneg %p174
        %p457 = pneg %p198
        %p458 = pneg %p195
        %p459 = pneg %p219
        %p460 = pneg %p216
        %p461 = pneg %p245
        %p462 = pneg %p242
        %s463 = sand.u32 %s232, 1
        %s464 = scalar_lea.sflag [#allocation4], %s463
        %s465 = sand.u32 %s232, 1
        %s466 = smul.addr %s465, 32
        %s467 = scalar_lea.vmem [#allocation16], %s466
        %s468 = smul.u32 2, %s30
        %s469 = smul.u32 2, %s30
        %v471 = vld [vmem:[%s397] sm:$0xff]
        %v472 = vld [vmem:[%s397 + $0x8] sm:$0xff]
        %v473 = vld [vmem:[%s397 + $0x10] sm:$0xff]
        %v474 = vld [vmem:[%s397 + $0x18] sm:$0xff]
        %v475 = vmul.f32 %v471, %v471
        %v476 = vmul.f32 %v472, %v472
        %v477 = vmul.f32 %v473, %v473
        %v478 = vmul.f32 %v474, %v474
        %479 = vadd.xlane.f32.xlu0 %v475
        %v480 = vpop.xlane.xlu0 %479
        %481 = vadd.xlane.f32.xlu0 %v476
        %v482 = vpop.xlane.xlu0 %481
        %483 = vadd.xlane.f32.xlu0 %v477
        %v484 = vpop.xlane.xlu0 %483
        %485 = vadd.xlane.f32.xlu0 %v478
        %v486 = vpop.xlane.xlu0 %485
        %v487 = vrcp.pop 128.0
        %v488 = vmul.f32 128.0, %v487
        %v489 = vsub.f32 1.0, %v488
        %v490 = vmul.f32 %v487, %v489
        %v491 = vadd.f32 %v487, %v490
        %vm492 = vweird.f32 %v487
        %v493 = vsel %vm492, %v487, %v491
        %v494 = vmul.f32 %v480, %v493
        %v495 = vmul.f32 %v482, %v493
        %v496 = vmul.f32 %v484, %v493
        %v497 = vmul.f32 %v486, %v493
        %v498 = vadd.f32 %v494, 1e-05
        %v499 = vadd.f32 %v495, 1e-05
        %v500 = vadd.f32 %v496, 1e-05
        %v501 = vadd.f32 %v497, 1e-05
        %v502 = vrsqrt.pop %v498
        %v503 = vmul.f32 %v502, %v498
        %v504 = vmul.f32 %v503, %v502
        %v505 = vmul.f32 0.5, %v504
        %v506 = vsub.f32 1.5, %v505
        %v507 = vmul.f32 %v502, %v506
        %vm508 = vweird.f32 %v498
        %vm509 = vweird.f32 %v502
        %vm510 = vmor %vm508, %vm509
        %v511 = vsel %vm510, %v502, %v507
        %v512 = vrsqrt.pop %v499
        %v513 = vmul.f32 %v512, %v499
        %v514 = vmul.f32 %v513, %v512
        %v515 = vmul.f32 0.5, %v514
        %v516 = vsub.f32 1.5, %v515
        %v517 = vmul.f32 %v512, %v516
        %vm518 = vweird.f32 %v499
        %vm519 = vweird.f32 %v512
        %vm520 = vmor %vm518, %vm519
        %v521 = vsel %vm520, %v512, %v517
        %v522 = vrsqrt.pop %v500
        %v523 = vmul.f32 %v522, %v500
        %v524 = vmul.f32 %v523, %v522
        %v525 = vmul.f32 0.5, %v524
        %v526 = vsub.f32 1.5, %v525
        %v527 = vmul.f32 %v522, %v526
        %vm528 = vweird.f32 %v500
        %vm529 = vweird.f32 %v522
        %vm530 = vmor %vm528, %vm529
        %v531 = vsel %vm530, %v522, %v527
        %v532 = vrsqrt.pop %v501
        %v533 = vmul.f32 %v532, %v501
        %v534 = vmul.f32 %v533, %v532
        %v535 = vmul.f32 0.5, %v534
        %v536 = vsub.f32 1.5, %v535
        %v537 = vmul.f32 %v532, %v536
        %vm538 = vweird.f32 %v501
        %vm539 = vweird.f32 %v532
        %vm540 = vmor %vm538, %vm539
        %v541 = vsel %vm540, %v532, %v537
        %v542 = vmul.f32 %v471, %v511
        %v543 = vmul.f32 %v472, %v521
        %v544 = vmul.f32 %v473, %v531
        %v545 = vmul.f32 %v474, %v541
        %v546 = vld [vmem:[#allocation5] sm:$0x1]
        %v548 = vperm.slane %v546, 0
        %v550 = vmul.f32 %v542, %v548
        %v551 = vmul.f32 %v543, %v548
        %v552 = vmul.f32 %v544, %v548
        %v553 = vmul.f32 %v545, %v548
        %v554 = vpack.c.bf16 %v551, %v550
        %v555 = vpack.c.bf16 %v553, %v552
        %v556 = vld [vmem:[#allocation7] sm:$0xff]
        %v557 = vld [vmem:[#allocation7 + $0x8] sm:$0xff]
        %v558 = vld [vmem:[#allocation7 + $0x10] sm:$0xff]
        %v559 = vld [vmem:[#allocation7 + $0x18] sm:$0xff]
        %v560 = vld [vmem:[#allocation7 + $0x20] sm:$0xff]
        %v561 = vld [vmem:[#allocation7 + $0x28] sm:$0xff]
        %v562 = vld [vmem:[#allocation7 + $0x30] sm:$0xff]
        %v563 = vld [vmem:[#allocation7 + $0x38] sm:$0xff]
        %v564 = vld [vmem:[#allocation7 + $0x40] sm:$0xff]
        %v565 = vld [vmem:[#allocation7 + $0x48] sm:$0xff]
        %v566 = vld [vmem:[#allocation7 + $0x50] sm:$0xff]
        %v567 = vld [vmem:[#allocation7 + $0x58] sm:$0xff]
        %v568 = vld [vmem:[#allocation7 + $0x60] sm:$0xff]
        %v569 = vld [vmem:[#allocation7 + $0x68] sm:$0xff]
        %v570 = vld [vmem:[#allocation7 + $0x70] sm:$0xff]
        %v571 = vld [vmem:[#allocation7 + $0x78] sm:$0xff]
        %v588 = vunpack.c.l.b16 %v556
        %v589 = vunpack.c.h.b16 %v556
        %v590 = vunpack.c.l.b16 %v557
        %v591 = vunpack.c.h.b16 %v557
        %v592 = vunpack.c.l.b16 %v558
        %v593 = vunpack.c.h.b16 %v558
        %v594 = vunpack.c.l.b16 %v559
        %v595 = vunpack.c.h.b16 %v559
        %v596 = vunpack.c.l.b16 %v560
        %v597 = vunpack.c.h.b16 %v560
        %v598 = vunpack.c.l.b16 %v561
        %v599 = vunpack.c.h.b16 %v561
        %v600 = vunpack.c.l.b16 %v562
        %v601 = vunpack.c.h.b16 %v562
        %v602 = vunpack.c.l.b16 %v563
        %v603 = vunpack.c.h.b16 %v563
        %v604 = vunpack.c.l.b16 %v564
        %v605 = vunpack.c.h.b16 %v564
        %v606 = vunpack.c.l.b16 %v565
        %v607 = vunpack.c.h.b16 %v565
        %v608 = vunpack.c.l.b16 %v566
        %v609 = vunpack.c.h.b16 %v566
        %v610 = vunpack.c.l.b16 %v567
        %v611 = vunpack.c.h.b16 %v567
        %v612 = vunpack.c.l.b16 %v568
        %v613 = vunpack.c.h.b16 %v568
        %v614 = vunpack.c.l.b16 %v569
        %v615 = vunpack.c.h.b16 %v569
        %v616 = vunpack.c.l.b16 %v570
        %v617 = vunpack.c.h.b16 %v570
        %v618 = vunpack.c.l.b16 %v571
        %v619 = vunpack.c.h.b16 %v571
        %v620 = vpack.c.b16 %v590, %v588
        %v621 = vpack.c.b16 %v591, %v589
        %v622 = vpack.c.b16 %v594, %v592
        %v623 = vpack.c.b16 %v595, %v593
        %v624 = vpack.c.b16 %v598, %v596
        %v625 = vpack.c.b16 %v599, %v597
        %v626 = vpack.c.b16 %v602, %v600
        %v627 = vpack.c.b16 %v603, %v601
        %v628 = vpack.c.b16 %v606, %v604
        %v629 = vpack.c.b16 %v607, %v605
        %v630 = vpack.c.b16 %v610, %v608
        %v631 = vpack.c.b16 %v611, %v609
        %v632 = vpack.c.b16 %v614, %v612
        %v633 = vpack.c.b16 %v615, %v613
        %v634 = vpack.c.b16 %v618, %v616
        %v635 = vpack.c.b16 %v619, %v617
        %652 = vmatpush.bf16.msra.mxu0 %v634
        %653 = vmatpush.bf16.msra.mxu0 %v632
        %654 = vmatpush.bf16.msra.mxu0 %v630
        %655 = vmatpush.bf16.msra.mxu0 %v628
        %656 = vmatpush.bf16.msra.mxu0 %v626
        %657 = vmatpush.bf16.msra.mxu0 %v624
        %658 = vmatpush.bf16.msra.mxu0 %v622
        %659 = vmatpush.bf16.msra.mxu0 %v620
        %660 = vmatmul.bf16.gmra.mxu0 %v554
        %v661 = vpop.f32.mrf.mxu0
        %v662 = vadd.f32 0.0, %v661
        %v663 = vpop.f32.mrf.mxu0
        %v664 = vadd.f32 0.0, %v663
        %665 = vmatmul.bf16.gmra.mxu0 %v555
        %v666 = vpop.f32.mrf.mxu0
        %v667 = vadd.f32 0.0, %v666
        %v668 = vpop.f32.mrf.mxu0
        %v669 = vadd.f32 0.0, %v668
        %670 = vdwg.mxu0
        %671 = vmatpush.bf16.msra.mxu0 %v635
        %672 = vmatpush.bf16.msra.mxu0 %v633
        %673 = vmatpush.bf16.msra.mxu0 %v631
        %674 = vmatpush.bf16.msra.mxu0 %v629
        %675 = vmatpush.bf16.msra.mxu0 %v627
        %676 = vmatpush.bf16.msra.mxu0 %v625
        %677 = vmatpush.bf16.msra.mxu0 %v623
        %678 = vmatpush.bf16.msra.mxu0 %v621
        %679 = vmatmul.bf16.gmra.mxu0 %v554
        %v680 = vpop.f32.mrf.mxu0
        %v681 = vadd.f32 0.0, %v680
        %v682 = vpop.f32.mrf.mxu0
        %v683 = vadd.f32 0.0, %v682
        %684 = vmatmul.bf16.gmra.mxu0 %v555
        %v685 = vpop.f32.mrf.mxu0
        %v686 = vadd.f32 0.0, %v685
        %v687 = vpop.f32.mrf.mxu0
        %v688 = vadd.f32 0.0, %v687
        %689 = vdwg.mxu0
        %v690 = vlaneseq
        %v691 = vand.u32 %v690, 127
        %v692 = vadd.s32 %v691, 128
        %v693 = vand.u32 %v691, 1
        %v694 = vand.u32 %v692, 1
        %vm695 = vcmp.eq.s32.totalorder %v693, 0
        %vm696 = vcmp.eq.s32.totalorder %v694, 0
        %697 = vrot.lane.b32.xlu0 %v662, 127
        %v698 = vpop.permute.xlu0 %697
        %699 = vrot.lane.b32.xlu0 %v664, 127
        %v700 = vpop.permute.xlu0 %699
        %701 = vrot.lane.b32.xlu0 %v667, 127
        %v702 = vpop.permute.xlu0 %701
        %703 = vrot.lane.b32.xlu0 %v669, 127
        %v704 = vpop.permute.xlu0 %703
        %705 = vrot.lane.b32.xlu0 %v681, 127
        %v706 = vpop.permute.xlu0 %705
        %707 = vrot.lane.b32.xlu0 %v683, 127
        %v708 = vpop.permute.xlu0 %707
        %709 = vrot.lane.b32.xlu0 %v686, 127
        %v710 = vpop.permute.xlu0 %709
        %711 = vrot.lane.b32.xlu0 %v688, 127
        %v712 = vpop.permute.xlu0 %711
        %vm713 = vcmp.lt.s32.totalorder %v691, 127
        %v714 = vsel %vm713, %v698, %v706
        %v715 = vsel %vm713, %v700, %v708
        %v716 = vsel %vm713, %v702, %v710
        %v717 = vsel %vm713, %v704, %v712
        %v718 = vsel %vm713, %v706, %v698
        %v719 = vsel %vm713, %v708, %v700
        %v720 = vsel %vm713, %v710, %v702
        %v721 = vsel %vm713, %v712, %v704
        %722 = vrot.lane.b32.xlu0 %v662, 1
        %v723 = vpop.permute.xlu0 %722
        %724 = vrot.lane.b32.xlu0 %v664, 1
        %v725 = vpop.permute.xlu0 %724
        %726 = vrot.lane.b32.xlu0 %v667, 1
        %v727 = vpop.permute.xlu0 %726
        %728 = vrot.lane.b32.xlu0 %v669, 1
        %v729 = vpop.permute.xlu0 %728
        %730 = vrot.lane.b32.xlu0 %v681, 1
        %v731 = vpop.permute.xlu0 %730
        %732 = vrot.lane.b32.xlu0 %v683, 1
        %v733 = vpop.permute.xlu0 %732
        %734 = vrot.lane.b32.xlu0 %v686, 1
        %v735 = vpop.permute.xlu0 %734
        %736 = vrot.lane.b32.xlu0 %v688, 1
        %v737 = vpop.permute.xlu0 %736
        %vm738 = vcmp.lt.s32.totalorder %v691, 1
        %v739 = vsel %vm738, %v723, %v731
        %v740 = vsel %vm738, %v725, %v733
        %v741 = vsel %vm738, %v727, %v735
        %v742 = vsel %vm738, %v729, %v737
        %v743 = vsel %vm738, %v731, %v723
        %v744 = vsel %vm738, %v733, %v725
        %v745 = vsel %vm738, %v735, %v727
        %v746 = vsel %vm738, %v737, %v729
        %v747 = vsel %vm695, %v714, %v743
        %v748 = vsel %vm696, %v718, %v739
        %v749 = vsel %vm695, %v715, %v744
        %v750 = vsel %vm696, %v719, %v740
        %v751 = vsel %vm695, %v716, %v745
        %v752 = vsel %vm696, %v720, %v741
        %v753 = vsel %vm695, %v717, %v746
        %v754 = vsel %vm696, %v721, %v742
        %v755 = vld [vmem:[#allocation8] sm:$0xff]
        %v756 = vld [vmem:[#allocation8 + $0x8] sm:$0xff]
        %v757 = vld [vmem:[#allocation8 + $0x10] sm:$0xff]
        %v758 = vld [vmem:[#allocation8 + $0x18] sm:$0xff]
        %v759 = vld [vmem:[#allocation8 + $0x20] sm:$0xff]
        %v760 = vld [vmem:[#allocation8 + $0x28] sm:$0xff]
        %v761 = vld [vmem:[#allocation8 + $0x30] sm:$0xff]
        %v762 = vld [vmem:[#allocation8 + $0x38] sm:$0xff]
        %v763 = vmul.f32 %v662, %v755
        %v764 = vmul.f32 %v681, %v756
        %v765 = vmul.f32 %v664, %v757
        %v766 = vmul.f32 %v683, %v758
        %v767 = vmul.f32 %v667, %v759
        %v768 = vmul.f32 %v686, %v760
        %v769 = vmul.f32 %v669, %v761
        %v770 = vmul.f32 %v688, %v762
        %v771 = vld [vmem:[#allocation10] sm:$0xff]
        %v772 = vld [vmem:[#allocation10 + $0x8] sm:$0xff]
        %v773 = vld [vmem:[#allocation10 + $0x10] sm:$0xff]
        %v774 = vld [vmem:[#allocation10 + $0x18] sm:$0xff]
        %v775 = vld [vmem:[#allocation10 + $0x20] sm:$0xff]
        %v776 = vld [vmem:[#allocation10 + $0x28] sm:$0xff]
        %v777 = vld [vmem:[#allocation10 + $0x30] sm:$0xff]
        %v778 = vld [vmem:[#allocation10 + $0x38] sm:$0xff]
        %v779 = vmul.f32 %v747, %v771
        %v780 = vmul.f32 %v748, %v772
        %v781 = vmul.f32 %v749, %v773
        %v782 = vmul.f32 %v750, %v774
        %v783 = vmul.f32 %v751, %v775
        %v784 = vmul.f32 %v752, %v776
        %v785 = vmul.f32 %v753, %v777
        %v786 = vmul.f32 %v754, %v778
        %v787 = vadd.f32 %v763, %v779
        %v788 = vadd.f32 %v764, %v780
        %v789 = vadd.f32 %v765, %v781
        %v790 = vadd.f32 %v766, %v782
        %v791 = vadd.f32 %v767, %v783
        %v792 = vadd.f32 %v768, %v784
        %v793 = vadd.f32 %v769, %v785
        %v794 = vadd.f32 %v770, %v786
        %v795 = vpack.c.bf16 %v788, %v787
        %v796 = vpack.c.bf16 %v790, %v789
        %v797 = vpack.c.bf16 %v792, %v791
        %v798 = vpack.c.bf16 %v794, %v793
        %v799 = vlaneseq
        %v800 = vshrl.u32 %v799, 7
        %v801 = vadd.s32 %v800, 8
        %vm802 = vcmp.le.s32.totalorder %v691, %v800
        %vm803 = vcmp.le.s32.totalorder %v691, %v801
        %v804 = vld [vmem:[#allocation11] sm:$0xf]
        %v805 = vld [vmem:[#allocation11 + $0x4] sm:$0xf]
        %v806 = vld [vmem:[#allocation11 + $0x8] sm:$0xf]
        %v807 = vld [vmem:[#allocation11 + $0xc] sm:$0xf]
        %v808 = vld [vmem:[#allocation11 + $0x10] sm:$0xf]
        %v809 = vld [vmem:[#allocation11 + $0x14] sm:$0xf]
        %v810 = vld [vmem:[#allocation11 + $0x18] sm:$0xf]
        %v811 = vld [vmem:[#allocation11 + $0x1c] sm:$0xf]
        %v812 = vld [vmem:[#allocation11 + $0x20] sm:$0xf]
        %v813 = vld [vmem:[#allocation11 + $0x24] sm:$0xf]
        %v814 = vld [vmem:[#allocation11 + $0x28] sm:$0xf]
        %v815 = vld [vmem:[#allocation11 + $0x2c] sm:$0xf]
        %v816 = vld [vmem:[#allocation11 + $0x30] sm:$0xf]
        %v817 = vld [vmem:[#allocation11 + $0x34] sm:$0xf]
        %v818 = vld [vmem:[#allocation11 + $0x38] sm:$0xf]
        %v819 = vld [vmem:[#allocation11 + $0x3c] sm:$0xf]
        %v822 = vunpack.c.l.b16 %v795
        %v823 = vunpack.c.l.b16 %v796
        %v824 = vpack.c.b16 %v823, %v822
        %v825 = vunpack.c.h.b16 %v795
        %v826 = vunpack.c.h.b16 %v796
        %v827 = vpack.c.b16 %v826, %v825
        %vm828 = vcmask 261120
        %v830 = vsel %vm828, %v824, 0
        %v833 = vsel %vm828, %v827, 0
        %835 = vmatpush.bf16.xpose.msra.mxu0 0
        %836 = vmatpush.bf16.xpose.msra.mxu0 0
        %837 = vmatpush.bf16.xpose.msra.mxu0 0
        %838 = vmatpush.bf16.xpose.msra.mxu0 0
        %839 = vmatpush.bf16.xpose.msra.mxu0 0
        %840 = vmatpush.bf16.xpose.msra.mxu0 0
        %841 = vmatpush.bf16.xpose.msra.mxu0 0
        %842 = vmatpush.bf16.xpose.msra.mxu0 %v833
        %843 = vmatmul.bf16.gmra.mxu0 %v830
        %v844 = vpop.f32.mrf.mxu0
        %v845 = vadd.f32 0.0, %v844
        %v846 = vpop.f32.mrf.mxu0
        %v847 = vadd.f32 0.0, %v846
        %848 = vdwg.mxu0
        %v849 = vsel %vm802, %v845, -1e+30
        %v850 = vsel %vm803, %v847, -1e+30
        %vm851 = vcmask 130048
        %v852 = vsel %vm851, %v849, -inf
        %853 = vmax.xlane.f32.xlu0 %v852
        %v854 = vpop.xlane.xlu0 %853
        %v855 = vsel %vm851, %v850, -inf
        %856 = vmax.xlane.f32.xlu0 %v855
        %v857 = vpop.xlane.xlu0 %856
        %v858 = vsub.f32 %v849, %v854
        %v859 = vsub.f32 %v850, %v857
        %v860 = vmul.f32 %v858, 1.442695
        %v861 = vpow.pop %v860
        %v862 = vmul.f32 %v859, 1.442695
        %v863 = vpow.pop %v862
        %v864 = vsel %vm851, %v861, 0.0
        %865 = vadd.xlane.f32.xlu0 %v864
        %v866 = vpop.xlane.xlu0 %865
        %v867 = vsel %vm851, %v863, 0.0
        %868 = vadd.xlane.f32.xlu0 %v867
        %v869 = vpop.xlane.xlu0 %868
        %v870 = vrcp.pop %v866
        %v871 = vrcp.pop %v869
        %v872 = vmul.f32 %v861, %v870
        %v873 = vmul.f32 %v863, %v871
        %v874 = vpack.c.bf16 %v873, %v872
        %875 = vrot.lane.b32.xlu0 %v827, 64
        %v876 = vpop.permute.xlu0 %875
        %v879 = vsel %vm851, %v874, 0
        %881 = vmatpush.bf16.msra.mxu0 0
        %882 = vmatpush.bf16.msra.mxu0 0
        %883 = vmatpush.bf16.msra.mxu0 0
        %884 = vmatpush.bf16.msra.mxu0 0
        %885 = vmatpush.bf16.msra.mxu0 0
        %886 = vmatpush.bf16.msra.mxu0 0
        %887 = vmatpush.bf16.msra.mxu0 0
        %888 = vmatpush.bf16.msra.mxu0 %v876
        %889 = vmatmul.bf16.gmra.mxu0 %v879
        %v890 = vpop.f32.mrf.mxu0
        %v891 = vadd.f32 0.0, %v890
        %v892 = vpop.f32.mrf.mxu0
        %v893 = vadd.f32 0.0, %v892
        %894 = vdwg.mxu0
        %v895 = vpack.c.bf16 %v893, %v891
        %896 = vrot.lane.b32.xlu0 %v824, 96
        %v897 = vpop.permute.xlu0 %896
        %v899 = vsel %vm828, %v897, 0
        %901 = vmatpush.bf16.xpose.msra.mxu0 0
        %902 = vmatpush.bf16.xpose.msra.mxu0 0
        %903 = vmatpush.bf16.xpose.msra.mxu0 0
        %904 = vmatpush.bf16.xpose.msra.mxu0 0
        %905 = vmatpush.bf16.xpose.msra.mxu0 0
        %906 = vmatpush.bf16.xpose.msra.mxu0 0
        %907 = vmatpush.bf16.xpose.msra.mxu0 0
        %908 = vmatpush.bf16.xpose.msra.mxu0 %v833
        %909 = vmatmul.bf16.gmra.mxu0 %v899
        %v910 = vpop.f32.mrf.mxu0
        %v911 = vadd.f32 0.0, %v910
        %v912 = vpop.f32.mrf.mxu0
        %v913 = vadd.f32 0.0, %v912
        %914 = vdwg.mxu0
        %v915 = vsel %vm802, %v911, -1e+30
        %v916 = vsel %vm803, %v913, -1e+30
        %v917 = vsel %vm851, %v915, -inf
        %918 = vmax.xlane.f32.xlu0 %v917
        %v919 = vpop.xlane.xlu0 %918
        %v920 = vsel %vm851, %v916, -inf
        %921 = vmax.xlane.f32.xlu0 %v920
        %v922 = vpop.xlane.xlu0 %921
        %v923 = vsub.f32 %v915, %v919
        %v924 = vsub.f32 %v916, %v922
        %v925 = vmul.f32 %v923, 1.442695
        %v926 = vpow.pop %v925
        %v927 = vmul.f32 %v924, 1.442695
        %v928 = vpow.pop %v927
        %v929 = vsel %vm851, %v926, 0.0
        %930 = vadd.xlane.f32.xlu0 %v929
        %v931 = vpop.xlane.xlu0 %930
        %v932 = vsel %vm851, %v928, 0.0
        %933 = vadd.xlane.f32.xlu0 %v932
        %v934 = vpop.xlane.xlu0 %933
        %v935 = vrcp.pop %v931
        %v936 = vrcp.pop %v934
        %v937 = vmul.f32 %v926, %v935
        %v938 = vmul.f32 %v928, %v936
        %v939 = vpack.c.bf16 %v938, %v937
        %v941 = vsel %vm851, %v939, 0
        %943 = vmatpush.bf16.msra.mxu0 0
        %944 = vmatpush.bf16.msra.mxu0 0
        %945 = vmatpush.bf16.msra.mxu0 0
        %946 = vmatpush.bf16.msra.mxu0 0
        %947 = vmatpush.bf16.msra.mxu0 0
        %948 = vmatpush.bf16.msra.mxu0 0
        %949 = vmatpush.bf16.msra.mxu0 0
        %950 = vmatpush.bf16.msra.mxu0 %v876
        %951 = vmatmul.bf16.gmra.mxu0 %v941
        %v952 = vpop.f32.mrf.mxu0
        %v953 = vadd.f32 0.0, %v952
        %v954 = vpop.f32.mrf.mxu0
        %v955 = vadd.f32 0.0, %v954
        %956 = vdwg.mxu0
        %v957 = vpack.c.bf16 %v955, %v953
        %v962 = vunpack.c.l.b16 %v808
        %v963 = vunpack.c.l.b16 %v809
        %v964 = vunpack.c.l.b16 %v810
        %v965 = vunpack.c.l.b16 %v811
        %v966 = vpack.c.b16 %v963, %v962
        %v967 = vpack.c.b16 %v965, %v964
        %v971 = vsel %vm828, %v957, 0
        %973 = vmatpush.bf16.msra.mxu0 0
        %974 = vmatpush.bf16.msra.mxu0 0
        %975 = vmatpush.bf16.msra.mxu0 0
        %976 = vmatpush.bf16.msra.mxu0 0
        %977 = vmatpush.bf16.msra.mxu0 0
        %978 = vmatpush.bf16.msra.mxu0 0
        %979 = vmatpush.bf16.msra.mxu0 %v967
        %980 = vmatpush.bf16.msra.mxu0 %v966
        %981 = vmatmul.bf16.gmra.mxu0 %v971
        %v982 = vpop.f32.mrf.mxu0
        %v983 = vadd.f32 0.0, %v982
        %v984 = vpop.f32.mrf.mxu0
        %v985 = vadd.f32 0.0, %v984
        %986 = vdwg.mxu0
        %v991 = vunpack.c.l.b16 %v804
        %v992 = vunpack.c.l.b16 %v805
        %v993 = vunpack.c.l.b16 %v806
        %v994 = vunpack.c.l.b16 %v807
        %v995 = vpack.c.b16 %v992, %v991
        %v996 = vpack.c.b16 %v994, %v993
        %v1000 = vsel %vm828, %v895, 0
        %1002 = vmatpush.bf16.msra.mxu0 0
        %1003 = vmatpush.bf16.msra.mxu0 0
        %1004 = vmatpush.bf16.msra.mxu0 0
        %1005 = vmatpush.bf16.msra.mxu0 0
        %1006 = vmatpush.bf16.msra.mxu0 0
        %1007 = vmatpush.bf16.msra.mxu0 0
        %1008 = vmatpush.bf16.msra.mxu0 %v996
        %1009 = vmatpush.bf16.msra.mxu0 %v995
        %1010 = vmatmul.bf16.gmra.mxu0 %v1000
        %v1011 = vpop.f32.mrf.mxu0
        %v1012 = vadd.f32 %v983, %v1011
        %v1013 = vpop.f32.mrf.mxu0
        %v1014 = vadd.f32 %v985, %v1013
        %1015 = vdwg.mxu0
        %1016 = vrot.lane.b32.xlu0 %v824, 64
        %v1017 = vpop.permute.xlu0 %1016
        %1018 = vrot.lane.b32.xlu0 %v827, 96
        %v1019 = vpop.permute.xlu0 %1018
        %v1021 = vsel %vm828, %v1017, 0
        %v1024 = vsel %vm828, %v1019, 0
        %1026 = vmatpush.bf16.xpose.msra.mxu0 0
        %1027 = vmatpush.bf16.xpose.msra.mxu0 0
        %1028 = vmatpush.bf16.xpose.msra.mxu0 0
        %1029 = vmatpush.bf16.xpose.msra.mxu0 0
        %1030 = vmatpush.bf16.xpose.msra.mxu0 0
        %1031 = vmatpush.bf16.xpose.msra.mxu0 0
        %1032 = vmatpush.bf16.xpose.msra.mxu0 0
        %1033 = vmatpush.bf16.xpose.msra.mxu0 %v1024
        %1034 = vmatmul.bf16.gmra.mxu0 %v1021
        %v1035 = vpop.f32.mrf.mxu0
        %v1036 = vadd.f32 0.0, %v1035
        %v1037 = vpop.f32.mrf.mxu0
        %v1038 = vadd.f32 0.0, %v1037
        %1039 = vdwg.mxu0
        %v1040 = vsel %vm802, %v1036, -1e+30
        %v1041 = vsel %vm803, %v1038, -1e+30
        %v1042 = vsel %vm851, %v1040, -inf
        %1043 = vmax.xlane.f32.xlu0 %v1042
        %v1044 = vpop.xlane.xlu0 %1043
        %v1045 = vsel %vm851, %v1041, -inf
        %1046 = vmax.xlane.f32.xlu0 %v1045
        %v1047 = vpop.xlane.xlu0 %1046
        %v1048 = vsub.f32 %v1040, %v1044
        %v1049 = vsub.f32 %v1041, %v1047
        %v1050 = vmul.f32 %v1048, 1.442695
        %v1051 = vpow.pop %v1050
        %v1052 = vmul.f32 %v1049, 1.442695
        %v1053 = vpow.pop %v1052
        %v1054 = vsel %vm851, %v1051, 0.0
        %1055 = vadd.xlane.f32.xlu0 %v1054
        %v1056 = vpop.xlane.xlu0 %1055
        %v1057 = vsel %vm851, %v1053, 0.0
        %1058 = vadd.xlane.f32.xlu0 %v1057
        %v1059 = vpop.xlane.xlu0 %1058
        %v1060 = vrcp.pop %v1056
        %v1061 = vrcp.pop %v1059
        %v1062 = vmul.f32 %v1051, %v1060
        %v1063 = vmul.f32 %v1053, %v1061
        %v1064 = vpack.c.bf16 %v1063, %v1062
        %1065 = vrot.lane.b32.xlu0 %v827, 32
        %v1066 = vpop.permute.xlu0 %1065
        %v1069 = vsel %vm851, %v1064, 0
        %1071 = vmatpush.bf16.msra.mxu0 0
        %1072 = vmatpush.bf16.msra.mxu0 0
        %1073 = vmatpush.bf16.msra.mxu0 0
        %1074 = vmatpush.bf16.msra.mxu0 0
        %1075 = vmatpush.bf16.msra.mxu0 0
        %1076 = vmatpush.bf16.msra.mxu0 0
        %1077 = vmatpush.bf16.msra.mxu0 0
        %1078 = vmatpush.bf16.msra.mxu0 %v1066
        %1079 = vmatmul.bf16.gmra.mxu0 %v1069
        %v1080 = vpop.f32.mrf.mxu0
        %v1081 = vadd.f32 0.0, %v1080
        %v1082 = vpop.f32.mrf.mxu0
        %v1083 = vadd.f32 0.0, %v1082
        %1084 = vdwg.mxu0
        %v1085 = vpack.c.bf16 %v1083, %v1081
        %v1090 = vunpack.c.l.b16 %v812
        %v1091 = vunpack.c.l.b16 %v813
        %v1092 = vunpack.c.l.b16 %v814
        %v1093 = vunpack.c.l.b16 %v815
        %v1094 = vpack.c.b16 %v1091, %v1090
        %v1095 = vpack.c.b16 %v1093, %v1092
        %v1099 = vsel %vm828, %v1085, 0
        %1101 = vmatpush.bf16.msra.mxu0 0
        %1102 = vmatpush.bf16.msra.mxu0 0
        %1103 = vmatpush.bf16.msra.mxu0 0
        %1104 = vmatpush.bf16.msra.mxu0 0
        %1105 = vmatpush.bf16.msra.mxu0 0
        %1106 = vmatpush.bf16.msra.mxu0 0
        %1107 = vmatpush.bf16.msra.mxu0 %v1095
        %1108 = vmatpush.bf16.msra.mxu0 %v1094
        %1109 = vmatmul.bf16.gmra.mxu0 %v1099
        %v1110 = vpop.f32.mrf.mxu0
        %v1111 = vadd.f32 0.0, %v1110
        %v1112 = vpop.f32.mrf.mxu0
        %v1113 = vadd.f32 0.0, %v1112
        %1114 = vdwg.mxu0
        %v1115 = vadd.f32 %v1012, %v1111
        %v1116 = vadd.f32 %v1014, %v1113
        %1117 = vrot.lane.b32.xlu0 %v824, 32
        %v1118 = vpop.permute.xlu0 %1117
        %v1120 = vsel %vm828, %v1118, 0
        %1122 = vmatpush.bf16.xpose.msra.mxu0 0
        %1123 = vmatpush.bf16.xpose.msra.mxu0 0
        %1124 = vmatpush.bf16.xpose.msra.mxu0 0
        %1125 = vmatpush.bf16.xpose.msra.mxu0 0
        %1126 = vmatpush.bf16.xpose.msra.mxu0 0
        %1127 = vmatpush.bf16.xpose.msra.mxu0 0
        %1128 = vmatpush.bf16.xpose.msra.mxu0 0
        %1129 = vmatpush.bf16.xpose.msra.mxu0 %v1024
        %1130 = vmatmul.bf16.gmra.mxu0 %v1120
        %v1131 = vpop.f32.mrf.mxu0
        %v1132 = vadd.f32 0.0, %v1131
        %v1133 = vpop.f32.mrf.mxu0
        %v1134 = vadd.f32 0.0, %v1133
        %1135 = vdwg.mxu0
        %v1136 = vsel %vm802, %v1132, -1e+30
        %v1137 = vsel %vm803, %v1134, -1e+30
        %v1138 = vsel %vm851, %v1136, -inf
        %1139 = vmax.xlane.f32.xlu0 %v1138
        %v1140 = vpop.xlane.xlu0 %1139
        %v1141 = vsel %vm851, %v1137, -inf
        %1142 = vmax.xlane.f32.xlu0 %v1141
        %v1143 = vpop.xlane.xlu0 %1142
        %v1144 = vsub.f32 %v1136, %v1140
        %v1145 = vsub.f32 %v1137, %v1143
        %v1146 = vmul.f32 %v1144, 1.442695
        %v1147 = vpow.pop %v1146
        %v1148 = vmul.f32 %v1145, 1.442695
        %v1149 = vpow.pop %v1148
        %v1150 = vsel %vm851, %v1147, 0.0
        %1151 = vadd.xlane.f32.xlu0 %v1150
        %v1152 = vpop.xlane.xlu0 %1151
        %v1153 = vsel %vm851, %v1149, 0.0
        %1154 = vadd.xlane.f32.xlu0 %v1153
        %v1155 = vpop.xlane.xlu0 %1154
        %v1156 = vrcp.pop %v1152
        %v1157 = vrcp.pop %v1155
        %v1158 = vmul.f32 %v1147, %v1156
        %v1159 = vmul.f32 %v1149, %v1157
        %v1160 = vpack.c.bf16 %v1159, %v1158
        %v1162 = vsel %vm851, %v1160, 0
        %1164 = vmatpush.bf16.msra.mxu0 0
        %1165 = vmatpush.bf16.msra.mxu0 0
        %1166 = vmatpush.bf16.msra.mxu0 0
        %1167 = vmatpush.bf16.msra.mxu0 0
        %1168 = vmatpush.bf16.msra.mxu0 0
        %1169 = vmatpush.bf16.msra.mxu0 0
        %1170 = vmatpush.bf16.msra.mxu0 0
        %1171 = vmatpush.bf16.msra.mxu0 %v1066
        %1172 = vmatmul.bf16.gmra.mxu0 %v1162
        %v1173 = vpop.f32.mrf.mxu0
        %v1174 = vadd.f32 0.0, %v1173
        %v1175 = vpop.f32.mrf.mxu0
        %v1176 = vadd.f32 0.0, %v1175
        %1177 = vdwg.mxu0
        %v1178 = vpack.c.bf16 %v1176, %v1174
        %v1183 = vunpack.c.l.b16 %v816
        %v1184 = vunpack.c.l.b16 %v817
        %v1185 = vunpack.c.l.b16 %v818
        %v1186 = vunpack.c.l.b16 %v819
        %v1187 = vpack.c.b16 %v1184, %v1183
        %v1188 = vpack.c.b16 %v1186, %v1185
        %v1192 = vsel %vm828, %v1178, 0
        %1194 = vmatpush.bf16.msra.mxu0 0
        %1195 = vmatpush.bf16.msra.mxu0 0
        %1196 = vmatpush.bf16.msra.mxu0 0
        %1197 = vmatpush.bf16.msra.mxu0 0
        %1198 = vmatpush.bf16.msra.mxu0 0
        %1199 = vmatpush.bf16.msra.mxu0 0
        %1200 = vmatpush.bf16.msra.mxu0 %v1188
        %1201 = vmatpush.bf16.msra.mxu0 %v1187
        %1202 = vmatmul.bf16.gmra.mxu0 %v1192
        %v1203 = vpop.f32.mrf.mxu0
        %v1204 = vadd.f32 0.0, %v1203
        %v1205 = vpop.f32.mrf.mxu0
        %v1206 = vadd.f32 0.0, %v1205
        %1207 = vdwg.mxu0
        %v1208 = vadd.f32 %v1115, %v1204
        %v1209 = vadd.f32 %v1116, %v1206
        %v1212 = vunpack.c.l.b16 %v797
        %v1213 = vunpack.c.l.b16 %v798
        %v1214 = vpack.c.b16 %v1213, %v1212
        %v1215 = vunpack.c.h.b16 %v797
        %v1216 = vunpack.c.h.b16 %v798
        %v1217 = vpack.c.b16 %v1216, %v1215
        %v1219 = vsel %vm828, %v1214, 0
        %v1222 = vsel %vm828, %v1217, 0
        %1224 = vmatpush.bf16.xpose.msra.mxu0 0
        %1225 = vmatpush.bf16.xpose.msra.mxu0 0
        %1226 = vmatpush.bf16.xpose.msra.mxu0 0
        %1227 = vmatpush.bf16.xpose.msra.mxu0 0
        %1228 = vmatpush.bf16.xpose.msra.mxu0 0
        %1229 = vmatpush.bf16.xpose.msra.mxu0 0
        %1230 = vmatpush.bf16.xpose.msra.mxu0 0
        %1231 = vmatpush.bf16.xpose.msra.mxu0 %v1222
        %1232 = vmatmul.bf16.gmra.mxu0 %v1219
        %v1233 = vpop.f32.mrf.mxu0
        %v1234 = vadd.f32 0.0, %v1233
        %v1235 = vpop.f32.mrf.mxu0
        %v1236 = vadd.f32 0.0, %v1235
        %1237 = vdwg.mxu0
        %v1238 = vsel %vm802, %v1234, -1e+30
        %v1239 = vsel %vm803, %v1236, -1e+30
        %v1240 = vsel %vm851, %v1238, -inf
        %1241 = vmax.xlane.f32.xlu0 %v1240
        %v1242 = vpop.xlane.xlu0 %1241
        %v1243 = vsel %vm851, %v1239, -inf
        %1244 = vmax.xlane.f32.xlu0 %v1243
        %v1245 = vpop.xlane.xlu0 %1244
        %v1246 = vsub.f32 %v1238, %v1242
        %v1247 = vsub.f32 %v1239, %v1245
        %v1248 = vmul.f32 %v1246, 1.442695
        %v1249 = vpow.pop %v1248
        %v1250 = vmul.f32 %v1247, 1.442695
        %v1251 = vpow.pop %v1250
        %v1252 = vsel %vm851, %v1249, 0.0
        %1253 = vadd.xlane.f32.xlu0 %v1252
        %v1254 = vpop.xlane.xlu0 %1253
        %v1255 = vsel %vm851, %v1251, 0.0
        %1256 = vadd.xlane.f32.xlu0 %v1255
        %v1257 = vpop.xlane.xlu0 %1256
        %v1258 = vrcp.pop %v1254
        %v1259 = vrcp.pop %v1257
        %v1260 = vmul.f32 %v1249, %v1258
        %v1261 = vmul.f32 %v1251, %v1259
        %v1262 = vpack.c.bf16 %v1261, %v1260
        %1263 = vrot.lane.b32.xlu0 %v1217, 64
        %v1264 = vpop.permute.xlu0 %1263
        %v1267 = vsel %vm851, %v1262, 0
        %1269 = vmatpush.bf16.msra.mxu0 0
        %1270 = vmatpush.bf16.msra.mxu0 0
        %1271 = vmatpush.bf16.msra.mxu0 0
        %1272 = vmatpush.bf16.msra.mxu0 0
        %1273 = vmatpush.bf16.msra.mxu0 0
        %1274 = vmatpush.bf16.msra.mxu0 0
        %1275 = vmatpush.bf16.msra.mxu0 0
        %1276 = vmatpush.bf16.msra.mxu0 %v1264
        %1277 = vmatmul.bf16.gmra.mxu0 %v1267
        %v1278 = vpop.f32.mrf.mxu0
        %v1279 = vadd.f32 0.0, %v1278
        %v1280 = vpop.f32.mrf.mxu0
        %v1281 = vadd.f32 0.0, %v1280
        %1282 = vdwg.mxu0
        %v1283 = vpack.c.bf16 %v1281, %v1279
        %1284 = vrot.lane.b32.xlu0 %v1214, 96
        %v1285 = vpop.permute.xlu0 %1284
        %v1287 = vsel %vm828, %v1285, 0
        %1289 = vmatpush.bf16.xpose.msra.mxu0 0
        %1290 = vmatpush.bf16.xpose.msra.mxu0 0
        %1291 = vmatpush.bf16.xpose.msra.mxu0 0
        %1292 = vmatpush.bf16.xpose.msra.mxu0 0
        %1293 = vmatpush.bf16.xpose.msra.mxu0 0
        %1294 = vmatpush.bf16.xpose.msra.mxu0 0
        %1295 = vmatpush.bf16.xpose.msra.mxu0 0
        %1296 = vmatpush.bf16.xpose.msra.mxu0 %v1222
        %1297 = vmatmul.bf16.gmra.mxu0 %v1287
        %v1298 = vpop.f32.mrf.mxu0
        %v1299 = vadd.f32 0.0, %v1298
        %v1300 = vpop.f32.mrf.mxu0
        %v1301 = vadd.f32 0.0, %v1300
        %1302 = vdwg.mxu0
        %v1303 = vsel %vm802, %v1299, -1e+30
        %v1304 = vsel %vm803, %v1301, -1e+30
        %v1305 = vsel %vm851, %v1303, -inf
        %1306 = vmax.xlane.f32.xlu0 %v1305
        %v1307 = vpop.xlane.xlu0 %1306
        %v1308 = vsel %vm851, %v1304, -inf
        %1309 = vmax.xlane.f32.xlu0 %v1308
        %v1310 = vpop.xlane.xlu0 %1309
        %v1311 = vsub.f32 %v1303, %v1307
        %v1312 = vsub.f32 %v1304, %v1310
        %v1313 = vmul.f32 %v1311, 1.442695
        %v1314 = vpow.pop %v1313
        %v1315 = vmul.f32 %v1312, 1.442695
        %v1316 = vpow.pop %v1315
        %v1317 = vsel %vm851, %v1314, 0.0
        %1318 = vadd.xlane.f32.xlu0 %v1317
        %v1319 = vpop.xlane.xlu0 %1318
        %v1320 = vsel %vm851, %v1316, 0.0
        %1321 = vadd.xlane.f32.xlu0 %v1320
        %v1322 = vpop.xlane.xlu0 %1321
        %v1323 = vrcp.pop %v1319
        %v1324 = vrcp.pop %v1322
        %v1325 = vmul.f32 %v1314, %v1323
        %v1326 = vmul.f32 %v1316, %v1324
        %v1327 = vpack.c.bf16 %v1326, %v1325
        %v1329 = vsel %vm851, %v1327, 0
        %1331 = vmatpush.bf16.msra.mxu0 0
        %1332 = vmatpush.bf16.msra.mxu0 0
        %1333 = vmatpush.bf16.msra.mxu0 0
        %1334 = vmatpush.bf16.msra.mxu0 0
        %1335 = vmatpush.bf16.msra.mxu0 0
        %1336 = vmatpush.bf16.msra.mxu0 0
        %1337 = vmatpush.bf16.msra.mxu0 0
        %1338 = vmatpush.bf16.msra.mxu0 %v1264
        %1339 = vmatmul.bf16.gmra.mxu0 %v1329
        %v1340 = vpop.f32.mrf.mxu0
        %v1341 = vadd.f32 0.0, %v1340
        %v1342 = vpop.f32.mrf.mxu0
        %v1343 = vadd.f32 0.0, %v1342
        %1344 = vdwg.mxu0
        %v1345 = vpack.c.bf16 %v1343, %v1341
        %v1347 = vsel %vm828, %v1345, 0
        %1349 = vmatpush.bf16.msra.mxu0 0
        %1350 = vmatpush.bf16.msra.mxu0 0
        %1351 = vmatpush.bf16.msra.mxu0 0
        %1352 = vmatpush.bf16.msra.mxu0 0
        %1353 = vmatpush.bf16.msra.mxu0 0
        %1354 = vmatpush.bf16.msra.mxu0 0
        %1355 = vmatpush.bf16.msra.mxu0 %v967
        %1356 = vmatpush.bf16.msra.mxu0 %v966
        %1357 = vmatmul.bf16.gmra.mxu0 %v1347
        %v1358 = vpop.f32.mrf.mxu0
        %v1359 = vadd.f32 0.0, %v1358
        %v1360 = vpop.f32.mrf.mxu0
        %v1361 = vadd.f32 0.0, %v1360
        %1362 = vdwg.mxu0
        %v1364 = vsel %vm828, %v1283, 0
        %1366 = vmatpush.bf16.msra.mxu0 0
        %1367 = vmatpush.bf16.msra.mxu0 0
        %1368 = vmatpush.bf16.msra.mxu0 0
        %1369 = vmatpush.bf16.msra.mxu0 0
        %1370 = vmatpush.bf16.msra.mxu0 0
        %1371 = vmatpush.bf16.msra.mxu0 0
        %1372 = vmatpush.bf16.msra.mxu0 %v996
        %1373 = vmatpush.bf16.msra.mxu0 %v995
        %1374 = vmatmul.bf16.gmra.mxu0 %v1364
        %v1375 = vpop.f32.mrf.mxu0
        %v1376 = vadd.f32 %v1359, %v1375
        %v1377 = vpop.f32.mrf.mxu0
        %v1378 = vadd.f32 %v1361, %v1377
        %1379 = vdwg.mxu0
        %1380 = vrot.lane.b32.xlu0 %v1214, 64
        %v1381 = vpop.permute.xlu0 %1380
        %1382 = vrot.lane.b32.xlu0 %v1217, 96
        %v1383 = vpop.permute.xlu0 %1382
        %v1385 = vsel %vm828, %v1381, 0
        %v1388 = vsel %vm828, %v1383, 0
        %1390 = vmatpush.bf16.xpose.msra.mxu0 0
        %1391 = vmatpush.bf16.xpose.msra.mxu0 0
        %1392 = vmatpush.bf16.xpose.msra.mxu0 0
        %1393 = vmatpush.bf16.xpose.msra.mxu0 0
        %1394 = vmatpush.bf16.xpose.msra.mxu0 0
        %1395 = vmatpush.bf16.xpose.msra.mxu0 0
        %1396 = vmatpush.bf16.xpose.msra.mxu0 0
        %1397 = vmatpush.bf16.xpose.msra.mxu0 %v1388
        %1398 = vmatmul.bf16.gmra.mxu0 %v1385
        %v1399 = vpop.f32.mrf.mxu0
        %v1400 = vadd.f32 0.0, %v1399
        %v1401 = vpop.f32.mrf.mxu0
        %v1402 = vadd.f32 0.0, %v1401
        %1403 = vdwg.mxu0
        %v1404 = vsel %vm802, %v1400, -1e+30
        %v1405 = vsel %vm803, %v1402, -1e+30
        %v1406 = vsel %vm851, %v1404, -inf
        %1407 = vmax.xlane.f32.xlu0 %v1406
        %v1408 = vpop.xlane.xlu0 %1407
        %v1409 = vsel %vm851, %v1405, -inf
        %1410 = vmax.xlane.f32.xlu0 %v1409
        %v1411 = vpop.xlane.xlu0 %1410
        %v1412 = vsub.f32 %v1404, %v1408
        %v1413 = vsub.f32 %v1405, %v1411
        %v1414 = vmul.f32 %v1412, 1.442695
        %v1415 = vpow.pop %v1414
        %v1416 = vmul.f32 %v1413, 1.442695
        %v1417 = vpow.pop %v1416
        %v1418 = vsel %vm851, %v1415, 0.0
        %1419 = vadd.xlane.f32.xlu0 %v1418
        %v1420 = vpop.xlane.xlu0 %1419
        %v1421 = vsel %vm851, %v1417, 0.0
        %1422 = vadd.xlane.f32.xlu0 %v1421
        %v1423 = vpop.xlane.xlu0 %1422
        %v1424 = vrcp.pop %v1420
        %v1425 = vrcp.pop %v1423
        %v1426 = vmul.f32 %v1415, %v1424
        %v1427 = vmul.f32 %v1417, %v1425
        %v1428 = vpack.c.bf16 %v1427, %v1426
        %1429 = vrot.lane.b32.xlu0 %v1217, 32
        %v1430 = vpop.permute.xlu0 %1429
        %v1433 = vsel %vm851, %v1428, 0
        %1435 = vmatpush.bf16.msra.mxu0 0
        %1436 = vmatpush.bf16.msra.mxu0 0
        %1437 = vmatpush.bf16.msra.mxu0 0
        %1438 = vmatpush.bf16.msra.mxu0 0
        %1439 = vmatpush.bf16.msra.mxu0 0
        %1440 = vmatpush.bf16.msra.mxu0 0
        %1441 = vmatpush.bf16.msra.mxu0 0
        %1442 = vmatpush.bf16.msra.mxu0 %v1430
        %1443 = vmatmul.bf16.gmra.mxu0 %v1433
        %v1444 = vpop.f32.mrf.mxu0
        %v1445 = vadd.f32 0.0, %v1444
        %v1446 = vpop.f32.mrf.mxu0
        %v1447 = vadd.f32 0.0, %v1446
        %1448 = vdwg.mxu0
        %v1449 = vpack.c.bf16 %v1447, %v1445
        %v1451 = vsel %vm828, %v1449, 0
        %1453 = vmatpush.bf16.msra.mxu0 0
        %1454 = vmatpush.bf16.msra.mxu0 0
        %1455 = vmatpush.bf16.msra.mxu0 0
        %1456 = vmatpush.bf16.msra.mxu0 0
        %1457 = vmatpush.bf16.msra.mxu0 0
        %1458 = vmatpush.bf16.msra.mxu0 0
        %1459 = vmatpush.bf16.msra.mxu0 %v1095
        %1460 = vmatpush.bf16.msra.mxu0 %v1094
        %1461 = vmatmul.bf16.gmra.mxu0 %v1451
        %v1462 = vpop.f32.mrf.mxu0
        %v1463 = vadd.f32 0.0, %v1462
        %v1464 = vpop.f32.mrf.mxu0
        %v1465 = vadd.f32 0.0, %v1464
        %1466 = vdwg.mxu0
        %v1467 = vadd.f32 %v1376, %v1463
        %v1468 = vadd.f32 %v1378, %v1465
        %1469 = vrot.lane.b32.xlu0 %v1214, 32
        %v1470 = vpop.permute.xlu0 %1469
        %v1472 = vsel %vm828, %v1470, 0
        %1474 = vmatpush.bf16.xpose.msra.mxu0 0
        %1475 = vmatpush.bf16.xpose.msra.mxu0 0
        %1476 = vmatpush.bf16.xpose.msra.mxu0 0
        %1477 = vmatpush.bf16.xpose.msra.mxu0 0
        %1478 = vmatpush.bf16.xpose.msra.mxu0 0
        %1479 = vmatpush.bf16.xpose.msra.mxu0 0
        %1480 = vmatpush.bf16.xpose.msra.mxu0 0
        %1481 = vmatpush.bf16.xpose.msra.mxu0 %v1388
        %1482 = vmatmul.bf16.gmra.mxu0 %v1472
        %v1483 = vpop.f32.mrf.mxu0
        %v1484 = vadd.f32 0.0, %v1483
        %v1485 = vpop.f32.mrf.mxu0
        %v1486 = vadd.f32 0.0, %v1485
        %1487 = vdwg.mxu0
        %v1488 = vsel %vm802, %v1484, -1e+30
        %v1489 = vsel %vm803, %v1486, -1e+30
        %v1490 = vsel %vm851, %v1488, -inf
        %1491 = vmax.xlane.f32.xlu0 %v1490
        %v1492 = vpop.xlane.xlu0 %1491
        %v1493 = vsel %vm851, %v1489, -inf
        %1494 = vmax.xlane.f32.xlu0 %v1493
        %v1495 = vpop.xlane.xlu0 %1494
        %v1496 = vsub.f32 %v1488, %v1492
        %v1497 = vsub.f32 %v1489, %v1495
        %v1498 = vmul.f32 %v1496, 1.442695
        %v1499 = vpow.pop %v1498
        %v1500 = vmul.f32 %v1497, 1.442695
        %v1501 = vpow.pop %v1500
        %v1502 = vsel %vm851, %v1499, 0.0
        %1503 = vadd.xlane.f32.xlu0 %v1502
        %v1504 = vpop.xlane.xlu0 %1503
        %v1505 = vsel %vm851, %v1501, 0.0
        %1506 = vadd.xlane.f32.xlu0 %v1505
        %v1507 = vpop.xlane.xlu0 %1506
        %v1508 = vrcp.pop %v1504
        %v1509 = vrcp.pop %v1507
        %v1510 = vmul.f32 %v1499, %v1508
        %v1511 = vmul.f32 %v1501, %v1509
        %v1512 = vpack.c.bf16 %v1511, %v1510
        %v1514 = vsel %vm851, %v1512, 0
        %1516 = vmatpush.bf16.msra.mxu0 0
        %1517 = vmatpush.bf16.msra.mxu0 0
        %1518 = vmatpush.bf16.msra.mxu0 0
        %1519 = vmatpush.bf16.msra.mxu0 0
        %1520 = vmatpush.bf16.msra.mxu0 0
        %1521 = vmatpush.bf16.msra.mxu0 0
        %1522 = vmatpush.bf16.msra.mxu0 0
        %1523 = vmatpush.bf16.msra.mxu0 %v1430
        %1524 = vmatmul.bf16.gmra.mxu0 %v1514
        %v1525 = vpop.f32.mrf.mxu0
        %v1526 = vadd.f32 0.0, %v1525
        %v1527 = vpop.f32.mrf.mxu0
        %v1528 = vadd.f32 0.0, %v1527
        %1529 = vdwg.mxu0
        %v1530 = vpack.c.bf16 %v1528, %v1526
        %v1532 = vsel %vm828, %v1530, 0
        %1534 = vmatpush.bf16.msra.mxu0 0
        %1535 = vmatpush.bf16.msra.mxu0 0
        %1536 = vmatpush.bf16.msra.mxu0 0
        %1537 = vmatpush.bf16.msra.mxu0 0
        %1538 = vmatpush.bf16.msra.mxu0 0
        %1539 = vmatpush.bf16.msra.mxu0 0
        %1540 = vmatpush.bf16.msra.mxu0 %v1188
        %1541 = vmatpush.bf16.msra.mxu0 %v1187
        %1542 = vmatmul.bf16.gmra.mxu0 %v1532
        %v1543 = vpop.f32.mrf.mxu0
        %v1544 = vadd.f32 0.0, %v1543
        %v1545 = vpop.f32.mrf.mxu0
        %v1546 = vadd.f32 0.0, %v1545
        %1547 = vdwg.mxu0
        %v1548 = vadd.f32 %v1467, %v1544
        %v1549 = vadd.f32 %v1468, %v1546
        %v1550 = vadd.f32 %v471, %v1208
        %v1551 = vadd.f32 %v472, %v1209
        %v1552 = vadd.f32 %v473, %v1548
        %v1553 = vadd.f32 %v474, %v1549
        %v1554 = vmul.f32 %v1550, %v1550
        %v1555 = vmul.f32 %v1551, %v1551
        %v1556 = vmul.f32 %v1552, %v1552
        %v1557 = vmul.f32 %v1553, %v1553
        %1558 = vadd.xlane.f32.xlu0 %v1554
        %v1559 = vpop.xlane.xlu0 %1558
        %1560 = vadd.xlane.f32.xlu0 %v1555
        %v1561 = vpop.xlane.xlu0 %1560
        %1562 = vadd.xlane.f32.xlu0 %v1556
        %v1563 = vpop.xlane.xlu0 %1562
        %1564 = vadd.xlane.f32.xlu0 %v1557
        %v1565 = vpop.xlane.xlu0 %1564
        %v1566 = vmul.f32 %v1559, %v493
        %v1567 = vmul.f32 %v1561, %v493
        %v1568 = vmul.f32 %v1563, %v493
        %v1569 = vmul.f32 %v1565, %v493
        %v1570 = vadd.f32 %v1566, 1e-05
        %v1571 = vadd.f32 %v1567, 1e-05
        %v1572 = vadd.f32 %v1568, 1e-05
        %v1573 = vadd.f32 %v1569, 1e-05
        %v1574 = vrsqrt.pop %v1570
        %v1575 = vmul.f32 %v1574, %v1570
        %v1576 = vmul.f32 %v1575, %v1574
        %v1577 = vmul.f32 0.5, %v1576
        %v1578 = vsub.f32 1.5, %v1577
        %v1579 = vmul.f32 %v1574, %v1578
        %vm1580 = vweird.f32 %v1570
        %vm1581 = vweird.f32 %v1574
        %vm1582 = vmor %vm1580, %vm1581
        %v1583 = vsel %vm1582, %v1574, %v1579
        %v1584 = vrsqrt.pop %v1571
        %v1585 = vmul.f32 %v1584, %v1571
        %v1586 = vmul.f32 %v1585, %v1584
        %v1587 = vmul.f32 0.5, %v1586
        %v1588 = vsub.f32 1.5, %v1587
        %v1589 = vmul.f32 %v1584, %v1588
        %vm1590 = vweird.f32 %v1571
        %vm1591 = vweird.f32 %v1584
        %vm1592 = vmor %vm1590, %vm1591
        %v1593 = vsel %vm1592, %v1584, %v1589
        %v1594 = vrsqrt.pop %v1572
        %v1595 = vmul.f32 %v1594, %v1572
        %v1596 = vmul.f32 %v1595, %v1594
        %v1597 = vmul.f32 0.5, %v1596
        %v1598 = vsub.f32 1.5, %v1597
        %v1599 = vmul.f32 %v1594, %v1598
        %vm1600 = vweird.f32 %v1572
        %vm1601 = vweird.f32 %v1594
        %vm1602 = vmor %vm1600, %vm1601
        %v1603 = vsel %vm1602, %v1594, %v1599
        %v1604 = vrsqrt.pop %v1573
        %v1605 = vmul.f32 %v1604, %v1573
        %v1606 = vmul.f32 %v1605, %v1604
        %v1607 = vmul.f32 0.5, %v1606
        %v1608 = vsub.f32 1.5, %v1607
        %v1609 = vmul.f32 %v1604, %v1608
        %vm1610 = vweird.f32 %v1573
        %vm1611 = vweird.f32 %v1604
        %vm1612 = vmor %vm1610, %vm1611
        %v1613 = vsel %vm1612, %v1604, %v1609
        %v1614 = vmul.f32 %v1550, %v1583
        %v1615 = vmul.f32 %v1551, %v1593
        %v1616 = vmul.f32 %v1552, %v1603
        %v1617 = vmul.f32 %v1553, %v1613
        %v1618 = vld [vmem:[%s6] sm:$0x1]
        %v1620 = vperm.slane %v1618, 0
        %v1622 = vmul.f32 %v1614, %v1620
        %v1623 = vmul.f32 %v1615, %v1620
        %v1624 = vmul.f32 %v1616, %v1620
        %v1625 = vmul.f32 %v1617, %v1620
        %v1626 = vpack.c.bf16 %v1623, %v1622
        %v1627 = vpack.c.bf16 %v1625, %v1624
        %v1628 = vld [vmem:[#allocation13] sm:$0xff]
        %v1629 = vld [vmem:[#allocation13 + $0x8] sm:$0xff]
        %v1630 = vld [vmem:[#allocation13 + $0x10] sm:$0xff]
        %v1631 = vld [vmem:[#allocation13 + $0x18] sm:$0xff]
        %v1632 = vld [vmem:[#allocation13 + $0x20] sm:$0xff]
        %v1633 = vld [vmem:[#allocation13 + $0x28] sm:$0xff]
        %v1634 = vld [vmem:[#allocation13 + $0x30] sm:$0xff]
        %v1635 = vld [vmem:[#allocation13 + $0x38] sm:$0xff]
        %v1636 = vld [vmem:[#allocation13 + $0x40] sm:$0xff]
        %v1637 = vld [vmem:[#allocation13 + $0x48] sm:$0xff]
        %v1638 = vld [vmem:[#allocation13 + $0x50] sm:$0xff]
        %v1639 = vld [vmem:[#allocation13 + $0x58] sm:$0xff]
        %v1640 = vld [vmem:[#allocation13 + $0x60] sm:$0xff]
        %v1641 = vld [vmem:[#allocation13 + $0x68] sm:$0xff]
        %v1642 = vld [vmem:[#allocation13 + $0x70] sm:$0xff]
        %v1643 = vld [vmem:[#allocation13 + $0x78] sm:$0xff]
        %v1644 = vld [vmem:[#allocation13 + $0x80] sm:$0xff]
        %v1645 = vld [vmem:[#allocation13 + $0x88] sm:$0xff]
        %v1646 = vld [vmem:[#allocation13 + $0x90] sm:$0xff]
        %v1647 = vld [vmem:[#allocation13 + $0x98] sm:$0xff]
        %v1648 = vld [vmem:[#allocation13 + $0xa0] sm:$0xff]
        %v1649 = vld [vmem:[#allocation13 + $0xa8] sm:$0xff]
        %v1650 = vld [vmem:[#allocation13 + $0xb0] sm:$0xff]
        %v1651 = vld [vmem:[#allocation13 + $0xb8] sm:$0xff]
        %v1652 = vld [vmem:[#allocation13 + $0xc0] sm:$0xff]
        %v1653 = vld [vmem:[#allocation13 + $0xc8] sm:$0xff]
        %v1654 = vld [vmem:[#allocation13 + $0xd0] sm:$0xff]
        %v1655 = vld [vmem:[#allocation13 + $0xd8] sm:$0xff]
        %v1656 = vld [vmem:[#allocation13 + $0xe0] sm:$0xff]
        %v1657 = vld [vmem:[#allocation13 + $0xe8] sm:$0xff]
        %v1658 = vld [vmem:[#allocation13 + $0xf0] sm:$0xff]
        %v1659 = vld [vmem:[#allocation13 + $0xf8] sm:$0xff]
        %v1692 = vunpack.c.l.b16 %v1628
        %v1693 = vunpack.c.h.b16 %v1628
        %v1694 = vunpack.c.l.b16 %v1629
        %v1695 = vunpack.c.h.b16 %v1629
        %v1696 = vunpack.c.l.b16 %v1630
        %v1697 = vunpack.c.h.b16 %v1630
        %v1698 = vunpack.c.l.b16 %v1631
        %v1699 = vunpack.c.h.b16 %v1631
        %v1700 = vunpack.c.l.b16 %v1632
        %v1701 = vunpack.c.h.b16 %v1632
        %v1702 = vunpack.c.l.b16 %v1633
        %v1703 = vunpack.c.h.b16 %v1633
        %v1704 = vunpack.c.l.b16 %v1634
        %v1705 = vunpack.c.h.b16 %v1634
        %v1706 = vunpack.c.l.b16 %v1635
        %v1707 = vunpack.c.h.b16 %v1635
        %v1708 = vunpack.c.l.b16 %v1636
        %v1709 = vunpack.c.h.b16 %v1636
        %v1710 = vunpack.c.l.b16 %v1637
        %v1711 = vunpack.c.h.b16 %v1637
        %v1712 = vunpack.c.l.b16 %v1638
        %v1713 = vunpack.c.h.b16 %v1638
        %v1714 = vunpack.c.l.b16 %v1639
        %v1715 = vunpack.c.h.b16 %v1639
        %v1716 = vunpack.c.l.b16 %v1640
        %v1717 = vunpack.c.h.b16 %v1640
        %v1718 = vunpack.c.l.b16 %v1641
        %v1719 = vunpack.c.h.b16 %v1641
        %v1720 = vunpack.c.l.b16 %v1642
        %v1721 = vunpack.c.h.b16 %v1642
        %v1722 = vunpack.c.l.b16 %v1643
        %v1723 = vunpack.c.h.b16 %v1643
        %v1724 = vunpack.c.l.b16 %v1644
        %v1725 = vunpack.c.h.b16 %v1644
        %v1726 = vunpack.c.l.b16 %v1645
        %v1727 = vunpack.c.h.b16 %v1645
        %v1728 = vunpack.c.l.b16 %v1646
        %v1729 = vunpack.c.h.b16 %v1646
        %v1730 = vunpack.c.l.b16 %v1647
        %v1731 = vunpack.c.h.b16 %v1647
        %v1732 = vunpack.c.l.b16 %v1648
        %v1733 = vunpack.c.h.b16 %v1648
        %v1734 = vunpack.c.l.b16 %v1649
        %v1735 = vunpack.c.h.b16 %v1649
        %v1736 = vunpack.c.l.b16 %v1650
        %v1737 = vunpack.c.h.b16 %v1650
        %v1738 = vunpack.c.l.b16 %v1651
        %v1739 = vunpack.c.h.b16 %v1651
        %v1740 = vunpack.c.l.b16 %v1652
        %v1741 = vunpack.c.h.b16 %v1652
        %v1742 = vunpack.c.l.b16 %v1653
        %v1743 = vunpack.c.h.b16 %v1653
        %v1744 = vunpack.c.l.b16 %v1654
        %v1745 = vunpack.c.h.b16 %v1654
        %v1746 = vunpack.c.l.b16 %v1655
        %v1747 = vunpack.c.h.b16 %v1655
        %v1748 = vunpack.c.l.b16 %v1656
        %v1749 = vunpack.c.h.b16 %v1656
        %v1750 = vunpack.c.l.b16 %v1657
        %v1751 = vunpack.c.h.b16 %v1657
        %v1752 = vunpack.c.l.b16 %v1658
        %v1753 = vunpack.c.h.b16 %v1658
        %v1754 = vunpack.c.l.b16 %v1659
        %v1755 = vunpack.c.h.b16 %v1659
        %v1756 = vpack.c.b16 %v1696, %v1692
        %v1757 = vpack.c.b16 %v1697, %v1693
        %v1758 = vpack.c.b16 %v1698, %v1694
        %v1759 = vpack.c.b16 %v1699, %v1695
        %v1760 = vpack.c.b16 %v1704, %v1700
        %v1761 = vpack.c.b16 %v1705, %v1701
        %v1762 = vpack.c.b16 %v1706, %v1702
        %v1763 = vpack.c.b16 %v1707, %v1703
        %v1764 = vpack.c.b16 %v1712, %v1708
        %v1765 = vpack.c.b16 %v1713, %v1709
        %v1766 = vpack.c.b16 %v1714, %v1710
        %v1767 = vpack.c.b16 %v1715, %v1711
        %v1768 = vpack.c.b16 %v1720, %v1716
        %v1769 = vpack.c.b16 %v1721, %v1717
        %v1770 = vpack.c.b16 %v1722, %v1718
        %v1771 = vpack.c.b16 %v1723, %v1719
        %v1772 = vpack.c.b16 %v1728, %v1724
        %v1773 = vpack.c.b16 %v1729, %v1725
        %v1774 = vpack.c.b16 %v1730, %v1726
        %v1775 = vpack.c.b16 %v1731, %v1727
        %v1776 = vpack.c.b16 %v1736, %v1732
        %v1777 = vpack.c.b16 %v1737, %v1733
        %v1778 = vpack.c.b16 %v1738, %v1734
        %v1779 = vpack.c.b16 %v1739, %v1735
        %v1780 = vpack.c.b16 %v1744, %v1740
        %v1781 = vpack.c.b16 %v1745, %v1741
        %v1782 = vpack.c.b16 %v1746, %v1742
        %v1783 = vpack.c.b16 %v1747, %v1743
        %v1784 = vpack.c.b16 %v1752, %v1748
        %v1785 = vpack.c.b16 %v1753, %v1749
        %v1786 = vpack.c.b16 %v1754, %v1750
        %v1787 = vpack.c.b16 %v1755, %v1751
        %1820 = vmatpush.bf16.msra.mxu0 %v1784
        %1821 = vmatpush.bf16.msra.mxu0 %v1780
        %1822 = vmatpush.bf16.msra.mxu0 %v1776
        %1823 = vmatpush.bf16.msra.mxu0 %v1772
        %1824 = vmatpush.bf16.msra.mxu0 %v1768
        %1825 = vmatpush.bf16.msra.mxu0 %v1764
        %1826 = vmatpush.bf16.msra.mxu0 %v1760
        %1827 = vmatpush.bf16.msra.mxu0 %v1756
        %1828 = vmatmul.bf16.gmra.mxu0 %v1626
        %v1829 = vpop.f32.mrf.mxu0
        %v1830 = vadd.f32 0.0, %v1829
        %v1831 = vpop.f32.mrf.mxu0
        %v1832 = vadd.f32 0.0, %v1831
        %1833 = vmatmul.bf16.gmra.mxu0 %v1627
        %v1834 = vpop.f32.mrf.mxu0
        %v1835 = vadd.f32 0.0, %v1834
        %v1836 = vpop.f32.mrf.mxu0
        %v1837 = vadd.f32 0.0, %v1836
        %1838 = vdwg.mxu0
        %1839 = vmatpush.bf16.msra.mxu0 %v1785
        %1840 = vmatpush.bf16.msra.mxu0 %v1781
        %1841 = vmatpush.bf16.msra.mxu0 %v1777
        %1842 = vmatpush.bf16.msra.mxu0 %v1773
        %1843 = vmatpush.bf16.msra.mxu0 %v1769
        %1844 = vmatpush.bf16.msra.mxu0 %v1765
        %1845 = vmatpush.bf16.msra.mxu0 %v1761
        %1846 = vmatpush.bf16.msra.mxu0 %v1757
        %1847 = vmatmul.bf16.gmra.mxu0 %v1626
        %v1848 = vpop.f32.mrf.mxu0
        %v1849 = vadd.f32 0.0, %v1848
        %v1850 = vpop.f32.mrf.mxu0
        %v1851 = vadd.f32 0.0, %v1850
        %1852 = vmatmul.bf16.gmra.mxu0 %v1627
        %v1853 = vpop.f32.mrf.mxu0
        %v1854 = vadd.f32 0.0, %v1853
        %v1855 = vpop.f32.mrf.mxu0
        %v1856 = vadd.f32 0.0, %v1855
        %1857 = vdwg.mxu0
        %1858 = vmatpush.bf16.msra.mxu0 %v1786
        %1859 = vmatpush.bf16.msra.mxu0 %v1782
        %1860 = vmatpush.bf16.msra.mxu0 %v1778
        %1861 = vmatpush.bf16.msra.mxu0 %v1774
        %1862 = vmatpush.bf16.msra.mxu0 %v1770
        %1863 = vmatpush.bf16.msra.mxu0 %v1766
        %1864 = vmatpush.bf16.msra.mxu0 %v1762
        %1865 = vmatpush.bf16.msra.mxu0 %v1758
        %1866 = vmatmul.bf16.gmra.mxu0 %v1626
        %v1867 = vpop.f32.mrf.mxu0
        %v1868 = vadd.f32 0.0, %v1867
        %v1869 = vpop.f32.mrf.mxu0
        %v1870 = vadd.f32 0.0, %v1869
        %1871 = vmatmul.bf16.gmra.mxu0 %v1627
        %v1872 = vpop.f32.mrf.mxu0
        %v1873 = vadd.f32 0.0, %v1872
        %v1874 = vpop.f32.mrf.mxu0
        %v1875 = vadd.f32 0.0, %v1874
        %1876 = vdwg.mxu0
        %1877 = vmatpush.bf16.msra.mxu0 %v1787
        %1878 = vmatpush.bf16.msra.mxu0 %v1783
        %1879 = vmatpush.bf16.msra.mxu0 %v1779
        %1880 = vmatpush.bf16.msra.mxu0 %v1775
        %1881 = vmatpush.bf16.msra.mxu0 %v1771
        %1882 = vmatpush.bf16.msra.mxu0 %v1767
        %1883 = vmatpush.bf16.msra.mxu0 %v1763
        %1884 = vmatpush.bf16.msra.mxu0 %v1759
        %1885 = vmatmul.bf16.gmra.mxu0 %v1626
        %v1886 = vpop.f32.mrf.mxu0
        %v1887 = vadd.f32 0.0, %v1886
        %v1888 = vpop.f32.mrf.mxu0
        %v1889 = vadd.f32 0.0, %v1888
        %1890 = vmatmul.bf16.gmra.mxu0 %v1627
        %v1891 = vpop.f32.mrf.mxu0
        %v1892 = vadd.f32 0.0, %v1891
        %v1893 = vpop.f32.mrf.mxu0
        %v1894 = vadd.f32 0.0, %v1893
        %1895 = vdwg.mxu0
        %v1896 = vxor.u32 %v1830, 2147483648
        %v1897 = vxor.u32 %v1849, 2147483648
        %v1898 = vxor.u32 %v1832, 2147483648
        %v1899 = vxor.u32 %v1851, 2147483648
        %v1900 = vxor.u32 %v1835, 2147483648
        %v1901 = vxor.u32 %v1854, 2147483648
        %v1902 = vxor.u32 %v1837, 2147483648
        %v1903 = vxor.u32 %v1856, 2147483648
        %v1904 = vmul.f32 %v1896, 1.442695
        %v1905 = vpow.pop %v1904
        %v1906 = vmul.f32 %v1897, 1.442695
        %v1907 = vpow.pop %v1906
        %v1908 = vmul.f32 %v1898, 1.442695
        %v1909 = vpow.pop %v1908
        %v1910 = vmul.f32 %v1899, 1.442695
        %v1911 = vpow.pop %v1910
        %v1912 = vmul.f32 %v1900, 1.442695
        %v1913 = vpow.pop %v1912
        %v1914 = vmul.f32 %v1901, 1.442695
        %v1915 = vpow.pop %v1914
        %v1916 = vmul.f32 %v1902, 1.442695
        %v1917 = vpow.pop %v1916
        %v1918 = vmul.f32 %v1903, 1.442695
        %v1919 = vpow.pop %v1918
        %v1920 = vadd.f32 %v1905, 1.0
        %v1921 = vadd.f32 %v1907, 1.0
        %v1922 = vadd.f32 %v1909, 1.0
        %v1923 = vadd.f32 %v1911, 1.0
        %v1924 = vadd.f32 %v1913, 1.0
        %v1925 = vadd.f32 %v1915, 1.0
        %v1926 = vadd.f32 %v1917, 1.0
        %v1927 = vadd.f32 %v1919, 1.0
        %v1928 = vrcp.pop %v1920
        %v1929 = vmul.f32 %v1920, %v1928
        %v1930 = vsub.f32 1.0, %v1929
        %v1931 = vmul.f32 %v1928, %v1930
        %v1932 = vadd.f32 %v1928, %v1931
        %vm1933 = vweird.f32 %v1920
        %vm1934 = vweird.f32 %v1928
        %vm1935 = vmor %vm1933, %vm1934
        %v1936 = vsel %vm1935, %v1928, %v1932
        %v1937 = vand.u32 2147483647, %v1920
        %vm1938 = vcmp.eq.f32.partialorder %v1937, 8.507059e+37
        %v1939 = vand.u32 %v1920, 2147483648
        %v1940 = vor.u32 1.1754944e-38, %v1939
        %v1941 = vsel %vm1938, %v1940, %v1936
        %v1942 = vmul.f32 1.0, %v1941
        %v1943 = vrcp.pop %v1921
        %v1944 = vmul.f32 %v1921, %v1943
        %v1945 = vsub.f32 1.0, %v1944
        %v1946 = vmul.f32 %v1943, %v1945
        %v1947 = vadd.f32 %v1943, %v1946
        %vm1948 = vweird.f32 %v1921
        %vm1949 = vweird.f32 %v1943
        %vm1950 = vmor %vm1948, %vm1949
        %v1951 = vsel %vm1950, %v1943, %v1947
        %v1952 = vand.u32 2147483647, %v1921
        %vm1953 = vcmp.eq.f32.partialorder %v1952, 8.507059e+37
        %v1954 = vand.u32 %v1921, 2147483648
        %v1955 = vor.u32 1.1754944e-38, %v1954
        %v1956 = vsel %vm1953, %v1955, %v1951
        %v1957 = vmul.f32 1.0, %v1956
        %v1958 = vrcp.pop %v1922
        %v1959 = vmul.f32 %v1922, %v1958
        %v1960 = vsub.f32 1.0, %v1959
        %v1961 = vmul.f32 %v1958, %v1960
        %v1962 = vadd.f32 %v1958, %v1961
        %vm1963 = vweird.f32 %v1922
        %vm1964 = vweird.f32 %v1958
        %vm1965 = vmor %vm1963, %vm1964
        %v1966 = vsel %vm1965, %v1958, %v1962
        %v1967 = vand.u32 2147483647, %v1922
        %vm1968 = vcmp.eq.f32.partialorder %v1967, 8.507059e+37
        %v1969 = vand.u32 %v1922, 2147483648
        %v1970 = vor.u32 1.1754944e-38, %v1969
        %v1971 = vsel %vm1968, %v1970, %v1966
        %v1972 = vmul.f32 1.0, %v1971
        %v1973 = vrcp.pop %v1923
        %v1974 = vmul.f32 %v1923, %v1973
        %v1975 = vsub.f32 1.0, %v1974
        %v1976 = vmul.f32 %v1973, %v1975
        %v1977 = vadd.f32 %v1973, %v1976
        %vm1978 = vweird.f32 %v1923
        %vm1979 = vweird.f32 %v1973
        %vm1980 = vmor %vm1978, %vm1979
        %v1981 = vsel %vm1980, %v1973, %v1977
        %v1982 = vand.u32 2147483647, %v1923
        %vm1983 = vcmp.eq.f32.partialorder %v1982, 8.507059e+37
        %v1984 = vand.u32 %v1923, 2147483648
        %v1985 = vor.u32 1.1754944e-38, %v1984
        %v1986 = vsel %vm1983, %v1985, %v1981
        %v1987 = vmul.f32 1.0, %v1986
        %v1988 = vrcp.pop %v1924
        %v1989 = vmul.f32 %v1924, %v1988
        %v1990 = vsub.f32 1.0, %v1989
        %v1991 = vmul.f32 %v1988, %v1990
        %v1992 = vadd.f32 %v1988, %v1991
        %vm1993 = vweird.f32 %v1924
        %vm1994 = vweird.f32 %v1988
        %vm1995 = vmor %vm1993, %vm1994
        %v1996 = vsel %vm1995, %v1988, %v1992
        %v1997 = vand.u32 2147483647, %v1924
        %vm1998 = vcmp.eq.f32.partialorder %v1997, 8.507059e+37
        %v1999 = vand.u32 %v1924, 2147483648
        %v2000 = vor.u32 1.1754944e-38, %v1999
        %v2001 = vsel %vm1998, %v2000, %v1996
        %v2002 = vmul.f32 1.0, %v2001
        %v2003 = vrcp.pop %v1925
        %v2004 = vmul.f32 %v1925, %v2003
        %v2005 = vsub.f32 1.0, %v2004
        %v2006 = vmul.f32 %v2003, %v2005
        %v2007 = vadd.f32 %v2003, %v2006
        %vm2008 = vweird.f32 %v1925
        %vm2009 = vweird.f32 %v2003
        %vm2010 = vmor %vm2008, %vm2009
        %v2011 = vsel %vm2010, %v2003, %v2007
        %v2012 = vand.u32 2147483647, %v1925
        %vm2013 = vcmp.eq.f32.partialorder %v2012, 8.507059e+37
        %v2014 = vand.u32 %v1925, 2147483648
        %v2015 = vor.u32 1.1754944e-38, %v2014
        %v2016 = vsel %vm2013, %v2015, %v2011
        %v2017 = vmul.f32 1.0, %v2016
        %v2018 = vrcp.pop %v1926
        %v2019 = vmul.f32 %v1926, %v2018
        %v2020 = vsub.f32 1.0, %v2019
        %v2021 = vmul.f32 %v2018, %v2020
        %v2022 = vadd.f32 %v2018, %v2021
        %vm2023 = vweird.f32 %v1926
        %vm2024 = vweird.f32 %v2018
        %vm2025 = vmor %vm2023, %vm2024
        %v2026 = vsel %vm2025, %v2018, %v2022
        %v2027 = vand.u32 2147483647, %v1926
        %vm2028 = vcmp.eq.f32.partialorder %v2027, 8.507059e+37
        %v2029 = vand.u32 %v1926, 2147483648
        %v2030 = vor.u32 1.1754944e-38, %v2029
        %v2031 = vsel %vm2028, %v2030, %v2026
        %v2032 = vmul.f32 1.0, %v2031
        %v2033 = vrcp.pop %v1927
        %v2034 = vmul.f32 %v1927, %v2033
        %v2035 = vsub.f32 1.0, %v2034
        %v2036 = vmul.f32 %v2033, %v2035
        %v2037 = vadd.f32 %v2033, %v2036
        %vm2038 = vweird.f32 %v1927
        %vm2039 = vweird.f32 %v2033
        %vm2040 = vmor %vm2038, %vm2039
        %v2041 = vsel %vm2040, %v2033, %v2037
        %v2042 = vand.u32 2147483647, %v1927
        %vm2043 = vcmp.eq.f32.partialorder %v2042, 8.507059e+37
        %v2044 = vand.u32 %v1927, 2147483648
        %v2045 = vor.u32 1.1754944e-38, %v2044
        %v2046 = vsel %vm2043, %v2045, %v2041
        %v2047 = vmul.f32 1.0, %v2046
        %v2048 = vmul.f32 %v1830, %v1942
        %v2049 = vmul.f32 %v1849, %v1957
        %v2050 = vmul.f32 %v1832, %v1972
        %v2051 = vmul.f32 %v1851, %v1987
        %v2052 = vmul.f32 %v1835, %v2002
        %v2053 = vmul.f32 %v1854, %v2017
        %v2054 = vmul.f32 %v1837, %v2032
        %v2055 = vmul.f32 %v1856, %v2047
        %v2056 = vmul.f32 %v2048, %v1868
        %v2057 = vmul.f32 %v2049, %v1887
        %v2058 = vmul.f32 %v2050, %v1870
        %v2059 = vmul.f32 %v2051, %v1889
        %v2060 = vmul.f32 %v2052, %v1873
        %v2061 = vmul.f32 %v2053, %v1892
        %v2062 = vmul.f32 %v2054, %v1875
        %v2063 = vmul.f32 %v2055, %v1894
        %v2064 = vpack.c.bf16 %v2058, %v2056
        %v2065 = vpack.c.bf16 %v2059, %v2057
        %v2066 = vpack.c.bf16 %v2062, %v2060
        %v2067 = vpack.c.bf16 %v2063, %v2061
        %v2068 = vld [vmem:[#allocation14] sm:$0xf]
        %v2069 = vld [vmem:[#allocation14 + $0x4] sm:$0xf]
        %v2070 = vld [vmem:[#allocation14 + $0x8] sm:$0xf]
        %v2071 = vld [vmem:[#allocation14 + $0xc] sm:$0xf]
        %v2072 = vld [vmem:[#allocation14 + $0x10] sm:$0xf]
        %v2073 = vld [vmem:[#allocation14 + $0x14] sm:$0xf]
        %v2074 = vld [vmem:[#allocation14 + $0x18] sm:$0xf]
        %v2075 = vld [vmem:[#allocation14 + $0x1c] sm:$0xf]
        %v2076 = vld [vmem:[#allocation14 + $0x20] sm:$0xf]
        %v2077 = vld [vmem:[#allocation14 + $0x24] sm:$0xf]
        %v2078 = vld [vmem:[#allocation14 + $0x28] sm:$0xf]
        %v2079 = vld [vmem:[#allocation14 + $0x2c] sm:$0xf]
        %v2080 = vld [vmem:[#allocation14 + $0x30] sm:$0xf]
        %v2081 = vld [vmem:[#allocation14 + $0x34] sm:$0xf]
        %v2082 = vld [vmem:[#allocation14 + $0x38] sm:$0xf]
        %v2083 = vld [vmem:[#allocation14 + $0x3c] sm:$0xf]
        %v2084 = vld [vmem:[#allocation14 + $0x40] sm:$0xf]
        %v2085 = vld [vmem:[#allocation14 + $0x44] sm:$0xf]
        %v2086 = vld [vmem:[#allocation14 + $0x48] sm:$0xf]
        %v2087 = vld [vmem:[#allocation14 + $0x4c] sm:$0xf]
        %v2088 = vld [vmem:[#allocation14 + $0x50] sm:$0xf]
        %v2089 = vld [vmem:[#allocation14 + $0x54] sm:$0xf]
        %v2090 = vld [vmem:[#allocation14 + $0x58] sm:$0xf]
        %v2091 = vld [vmem:[#allocation14 + $0x5c] sm:$0xf]
        %v2092 = vld [vmem:[#allocation14 + $0x60] sm:$0xf]
        %v2093 = vld [vmem:[#allocation14 + $0x64] sm:$0xf]
        %v2094 = vld [vmem:[#allocation14 + $0x68] sm:$0xf]
        %v2095 = vld [vmem:[#allocation14 + $0x6c] sm:$0xf]
        %v2096 = vld [vmem:[#allocation14 + $0x70] sm:$0xf]
        %v2097 = vld [vmem:[#allocation14 + $0x74] sm:$0xf]
        %v2098 = vld [vmem:[#allocation14 + $0x78] sm:$0xf]
        %v2099 = vld [vmem:[#allocation14 + $0x7c] sm:$0xf]
        %v2132 = vunpack.c.l.b16 %v2068
        %v2133 = vunpack.c.l.b16 %v2069
        %v2134 = vunpack.c.l.b16 %v2070
        %v2135 = vunpack.c.l.b16 %v2071
        %v2136 = vunpack.c.l.b16 %v2072
        %v2137 = vunpack.c.l.b16 %v2073
        %v2138 = vunpack.c.l.b16 %v2074
        %v2139 = vunpack.c.l.b16 %v2075
        %v2140 = vunpack.c.l.b16 %v2076
        %v2141 = vunpack.c.l.b16 %v2077
        %v2142 = vunpack.c.l.b16 %v2078
        %v2143 = vunpack.c.l.b16 %v2079
        %v2144 = vunpack.c.l.b16 %v2080
        %v2145 = vunpack.c.l.b16 %v2081
        %v2146 = vunpack.c.l.b16 %v2082
        %v2147 = vunpack.c.l.b16 %v2083
        %v2148 = vunpack.c.l.b16 %v2084
        %v2149 = vunpack.c.l.b16 %v2085
        %v2150 = vunpack.c.l.b16 %v2086
        %v2151 = vunpack.c.l.b16 %v2087
        %v2152 = vunpack.c.l.b16 %v2088
        %v2153 = vunpack.c.l.b16 %v2089
        %v2154 = vunpack.c.l.b16 %v2090
        %v2155 = vunpack.c.l.b16 %v2091
        %v2156 = vunpack.c.l.b16 %v2092
        %v2157 = vunpack.c.l.b16 %v2093
        %v2158 = vunpack.c.l.b16 %v2094
        %v2159 = vunpack.c.l.b16 %v2095
        %v2160 = vunpack.c.l.b16 %v2096
        %v2161 = vunpack.c.l.b16 %v2097
        %v2162 = vunpack.c.l.b16 %v2098
        %v2163 = vunpack.c.l.b16 %v2099
        %v2164 = vpack.c.b16 %v2133, %v2132
        %v2165 = vpack.c.b16 %v2135, %v2134
        %v2166 = vpack.c.b16 %v2137, %v2136
        %v2167 = vpack.c.b16 %v2139, %v2138
        %v2168 = vpack.c.b16 %v2141, %v2140
        %v2169 = vpack.c.b16 %v2143, %v2142
        %v2170 = vpack.c.b16 %v2145, %v2144
        %v2171 = vpack.c.b16 %v2147, %v2146
        %v2172 = vpack.c.b16 %v2149, %v2148
        %v2173 = vpack.c.b16 %v2151, %v2150
        %v2174 = vpack.c.b16 %v2153, %v2152
        %v2175 = vpack.c.b16 %v2155, %v2154
        %v2176 = vpack.c.b16 %v2157, %v2156
        %v2177 = vpack.c.b16 %v2159, %v2158
        %v2178 = vpack.c.b16 %v2161, %v2160
        %v2179 = vpack.c.b16 %v2163, %v2162
        %2196 = vmatpush.bf16.msra.mxu0 %v2171
        %2197 = vmatpush.bf16.msra.mxu0 %v2170
        %2198 = vmatpush.bf16.msra.mxu0 %v2169
        %2199 = vmatpush.bf16.msra.mxu0 %v2168
        %2200 = vmatpush.bf16.msra.mxu0 %v2167
        %2201 = vmatpush.bf16.msra.mxu0 %v2166
        %2202 = vmatpush.bf16.msra.mxu0 %v2165
        %2203 = vmatpush.bf16.msra.mxu0 %v2164
        %2204 = vmatmul.bf16.gmra.mxu0 %v2064
        %v2205 = vpop.f32.mrf.mxu0
        %v2206 = vadd.f32 0.0, %v2205
        %v2207 = vpop.f32.mrf.mxu0
        %v2208 = vadd.f32 0.0, %v2207
        %2209 = vmatmul.bf16.gmra.mxu0 %v2066
        %v2210 = vpop.f32.mrf.mxu0
        %v2211 = vadd.f32 0.0, %v2210
        %v2212 = vpop.f32.mrf.mxu0
        %v2213 = vadd.f32 0.0, %v2212
        %2214 = vdwg.mxu0
        %2215 = vmatpush.bf16.msra.mxu0 %v2179
        %2216 = vmatpush.bf16.msra.mxu0 %v2178
        %2217 = vmatpush.bf16.msra.mxu0 %v2177
        %2218 = vmatpush.bf16.msra.mxu0 %v2176
        %2219 = vmatpush.bf16.msra.mxu0 %v2175
        %2220 = vmatpush.bf16.msra.mxu0 %v2174
        %2221 = vmatpush.bf16.msra.mxu0 %v2173
        %2222 = vmatpush.bf16.msra.mxu0 %v2172
        %2223 = vmatmul.bf16.gmra.mxu0 %v2065
        %v2224 = vpop.f32.mrf.mxu0
        %v2225 = vadd.f32 %v2206, %v2224
        %v2226 = vpop.f32.mrf.mxu0
        %v2227 = vadd.f32 %v2208, %v2226
        %2228 = vmatmul.bf16.gmra.mxu0 %v2067
        %v2229 = vpop.f32.mrf.mxu0
        %v2230 = vadd.f32 %v2211, %v2229
        %v2231 = vpop.f32.mrf.mxu0
        %v2232 = vadd.f32 %v2213, %v2231
        %2233 = vdwg.mxu0
        %v2234 = vadd.f32 %v1550, %v2225
        %v2235 = vadd.f32 %v1551, %v2227
        %v2236 = vadd.f32 %v1552, %v2230
        %v2237 = vadd.f32 %v1553, %v2232
        %2238 = vst [vmem:[%s467] sm:$0xff] %v2234
        %2239 = vst [vmem:[%s467 + $0x8] sm:$0xff] %v2235
        %2240 = vst [vmem:[%s467 + $0x10] sm:$0xff] %v2236
        %2241 = vst [vmem:[%s467 + $0x18] sm:$0xff] %v2237
        %s2242 = sand.u32 %s232, 1
        %s2243 = scalar_lea.sflag [#allocation4], %s2242
        %s2244 = sand.u32 %s232, 1
        %s2245 = smul.addr %s2244, 32
        %s2246 = scalar_lea.vmem [#allocation16], %s2245
        // Predicated region
        $region89: #{tpu_custom_call.1} parent=55 // pred_check
          %p2247 = pneg %p242
        $region90: #{tpu_custom_call.1} parent=55 // pred_check_branch
          %2249 = sbr.rel (%p2247) target = $region92
        $region91: #{tpu_custom_call.1} parent=55 // pred_region
          %s2250 = smul.u32 2, %s30
          %2252 = vsyncadd %s2243, 0
          %s2253 = smul.addr %s2250, 2
          %s2254 = smul.addr %s2253, 8
          %s2255 = scalar_lea.hbm %s9, %s2254
          %s2256 = sshll.u32 %s2246, 4
          %s2257 = int_to_ptr.vmem [resolvable:$true] %s2256
          %s2258 = sshll.u32 %s2255, 4
          %s2259 = int_to_ptr.hbm [resolvable:$true] %s2258
          %2264 = dma.vmem_to_hbm [thread:$0]  %s2257, 512, %s2259, %s2243, 128, 128, 8
        $region92: #{tpu_custom_call.1} parent=55 // pred_fallthru
          _
      $region56: #{tpu_custom_call.1} parent=5 // pred_fallthru
        _
      %p2265 = scmp.le.s32.totalorder 2, %s25
      // Predicated region
      $region93: #{tpu_custom_call.1} parent=5 // pred_check
        %p2266 = pneg %p2265
      $region94: #{tpu_custom_call.1} parent=5 // pred_check_branch
        %2268 = sbr.rel (%p2266) target = $region96
      $region95: #{tpu_custom_call.1} parent=5 // pred_region
        %s2269 = ssub.s32 %s25, 2
        // Predicated region
        $region97: #{tpu_custom_call.1} parent=95 // pred_check
          %p2270 = pneg %p248
        $region98: #{tpu_custom_call.1} parent=95 // pred_check_branch
          %2272 = sbr.rel (%p2270) target = $region100
        $region99: #{tpu_custom_call.1} parent=95 // pred_region
          %s2273 = sand.u32 %s233, 1
          %s2274 = scalar_lea.sflag [#allocation4], %s2273
          %s2275 = sand.u32 %s233, 1
          %s2276 = smul.addr %s2275, 32
          %s2277 = scalar_lea.vmem [#allocation16], %s2276
          %2279 = dma.done %s2274, 512
        $region100: #{tpu_custom_call.1} parent=95 // pred_fallthru
          _
      $region96: #{tpu_custom_call.1} parent=5 // pred_fallthru
        _
    $region6: #{tpu_custom_call.1} parent=1 // loop_footer
      %s29 = sadd.s32 1, %s25
    $region7: #{tpu_custom_call.1} parent=1 // loop_footer_branch
      %24 = sbr.rel target = $region3
    $region8: #{tpu_custom_call.1} parent=1 // loop_exit
      _
    %2280 = vsyncpa [#allocation3], 1
    %s2281 = scalar_lea.sflag [#allocation3], 1
    %2282 = vsyncpa %s2281, 1
    %2283 = vsyncpa [#allocation6], 1
    %2284 = vsyncpa [#allocation9], 1
    %2285 = vsyncpa [#allocation12], 1
    %2286 = vsyncpa [#allocation15], 1
    %2287 = vsyncpa [#allocation4], 1
    %s2288 = scalar_lea.sflag [#allocation4], 1
    %2289 = vsyncpa %s2288, 1

</llo_original>
